<compile_context>
chip_gen: v6e
topology: v6e:2x2x1
jax: 0.10.0
libtpu: 0.0.40
codegen_flags: <defaults>
</compile_context>

<pallas_src>
import functools

import jax
import jax.numpy as jnp
from jax import lax
from jax.experimental import pallas as pl
from jax.experimental.pallas import tpu as pltpu


def _filter_path_kernel(x_ref, wd_ref, bd_ref, wu_ref, bu_ref, delta_ref, *, W):
    """Fused filter path for the (batch-0) image.

    x_ref    : [M, Cv]        bf16 content slab, row-major (r = y*W + x), NHWC-flat
    wd_ref   : [3*Cv, 3*Cin]  bf16 down_sample weights (F1 folded),
                              layout [kx*Cv + c, ky*Cin + o]
    bd_ref   : [1, Cin]       f32  down_sample bias (F1 folded)
    wu_ref   : [9*Cin, Cv]    bf16 upsample weights (F2 folded),
                              layout [(ky*3 + kx)*Cin + j, v]
    bu_ref   : [1, Cv]        f32  upsample bias
    delta_ref: [M, Cv]        f32  output = upsample(...) before the residual add
    """
    f32, bf16 = jnp.float32, jnp.bfloat16
    M, Cv = x_ref.shape
    Cin = bd_ref.shape[-1]

    # Hoisted column-boundary masks, shared by both convs.  A +-1 shift of the
    # flat slab only wraps across an image-row boundary exactly where the
    # neighbouring column is out of the image -> mask to zero (= conv padding).
    col = lax.broadcasted_iota(jnp.int32, (M, 1), 0) % W
    has_left = col >= 1            # column x-1 exists
    has_right = col <= W - 2       # column x+1 exists

    def wtaps(v):
        # v: [M, C] f32.  Returns bf16 [M, 3C] with taps ordered kx = 0, 1, 2
        # (columns x-1, x, x+1).  Rolls run on the XLU; boundary cols zeroed.
        left = jnp.where(has_left, pltpu.roll(v, shift=1, axis=0), 0.0)
        right = jnp.where(has_right, pltpu.roll(v, shift=M - 1, axis=0), 0.0)
        return jnp.concatenate([left, v, right], axis=-1).astype(bf16)

    # ---- down_sample (+ folded F1): one big-N matmul, then H-tap combine ----
    x = x_ref[...].astype(f32)
    xc = wtaps(x)                                               # [M, 3*Cv] bf16
    p = jnp.dot(xc, wd_ref[...], preferred_element_type=f32)    # [M, 3*Cin] f32
    p0, p1, p2 = p[:, :Cin], p[:, Cin:2 * Cin], p[:, 2 * Cin:]
    zrow = jnp.zeros((W, Cin), f32)
    # mid[r] = p0[r-W] + p1[r] + p2[r+W]   (zero-filled at the H borders)
    mid = (p1
           + jnp.concatenate([zrow, p0[:M - W]], axis=0)
           + jnp.concatenate([p2[W:], zrow], axis=0)
           + bd_ref[...])
    mid = jnp.maximum(mid, 0.2 * mid)                           # LeakyReLU(0.2)

    # ---- upsample (+ folded F2): full 9-tap im2col -> one big-K matmul ----
    m3 = wtaps(mid)                                             # [M, 3*Cin] bf16
    zrow3 = jnp.zeros((W, 3 * Cin), bf16)
    ky0 = jnp.concatenate([zrow3, m3[:M - W]], axis=0)          # mid at row y-1
    ky2 = jnp.concatenate([m3[W:], zrow3], axis=0)              # mid at row y+1
    m9 = jnp.concatenate([ky0, m3, ky2], axis=-1)               # [M, 9*Cin] bf16
    delta_ref[...] = (jnp.dot(m9, wu_ref[...], preferred_element_type=f32)
                      + bu_ref[...])


def kernel_filter_forward(content_nchw, params):
    """KernelFilter.forward(content, style_weight=[1.0]) with style_num=1."""
    w_down, b_down, filt1, filt2, w_up, b_up = params
    B, Cv, H, W = content_nchw.shape
    Cin = filt1.shape[0]
    M = H * W
    hi = jax.lax.Precision.HIGHEST
    f32, bf16 = jnp.float32, jnp.bfloat16

    # --- one-time parameter prep (wrapper-side, exact linear folds) ---
    # F1 applied after down_sample:  w_down'[ky,kx] = w_down[ky,kx] @ F1^T,
    #                                b_down'        = F1 @ b_down
    w_down_f = jnp.einsum('yxci,oi->yxco', w_down, filt1, precision=hi)
    b_down_f = jnp.einsum('oi,i->o', filt1, b_down, precision=hi)
    # F2 applied before upsample:    w_up'[ky,kx]   = F2^T @ w_up[ky,kx]
    w_up_f = jnp.einsum('oj,yxov->yxjv', filt2, w_up, precision=hi)
    # Down conv weight: W-taps concatenated on the contraction axis AND the 3 ky
    # rows concatenated on the output axis -> [3*Cv, 3*Cin], one matmul.
    wd_cat = jnp.transpose(w_down_f, (1, 2, 0, 3)).reshape(3 * Cv, 3 * Cin)
    # Up conv weight: full 9-tap im2col layout, (ky, kx, cin)-major -> [9*Cin, Cv].
    wu_cat = w_up_f.reshape(9 * Cin, Cv)

    # Only batch element 0 goes through the filter path (chunk/zip truncation
    # against the batch-1 predicted filter); transpose just that one image.
    x0 = jnp.transpose(content_nchw[0], (1, 2, 0)).reshape(M, Cv)

    delta = pl.pallas_call(
        functools.partial(_filter_path_kernel, W=W),
        out_shape=jax.ShapeDtypeStruct((M, Cv), f32),
        grid=(1,),
        in_specs=[
            pl.BlockSpec((M, Cv), lambda i: (0, 0)),
            pl.BlockSpec((3 * Cv, 3 * Cin), lambda i: (0, 0)),
            pl.BlockSpec((1, Cin), lambda i: (0, 0)),
            pl.BlockSpec((9 * Cin, Cv), lambda i: (0, 0)),
            pl.BlockSpec((1, Cv), lambda i: (0, 0)),
        ],
        out_specs=pl.BlockSpec((M, Cv), lambda i: (0, 0)),
        compiler_params=pltpu.CompilerParams(
            dimension_semantics=("arbitrary",)),
    )(x0.astype(bf16),
      wd_cat.astype(bf16),
      b_down_f.reshape(1, Cin).astype(f32),
      wu_cat.astype(bf16),
      b_up.reshape(1, Cv).astype(f32))

    # Residual add stays in NCHW; only the single delta image is transposed back.
    delta_chw = jnp.transpose(delta.reshape(H, W, Cv), (2, 0, 1))
    return (content_nchw + delta_chw[None]).astype(content_nchw.dtype)


def _reference(content_nchw, params):
    """Pure-JAX reference mirroring the PyTorch forward exactly (HIGHEST precision)."""
    w_down, b_down, filt1, filt2, w_up, b_up = params

    def conv3x3(x, w_hwio, b):
        y = jax.lax.conv_general_dilated(
            x, w_hwio, window_strides=(1, 1), padding=((1, 1), (1, 1)),
            dimension_numbers=('NCHW', 'HWIO', 'NCHW'),
            precision=jax.lax.Precision.HIGHEST)
        return y + b[None, :, None, None]

    c = conv3x3(content_nchw, w_down, b_down)
    c0 = c[0:1]                                   # chunk/zip truncation quirk
    m = jnp.einsum('oi,bihw->bohw', filt1, c0,
                   precision=jax.lax.Precision.HIGHEST)
    m = jnp.where(m >= 0, m, 0.2 * m)             # LeakyReLU(0.2)
    m = jnp.einsum('oi,bihw->bohw', filt2, m,
                   precision=jax.lax.Precision.HIGHEST)
    up = conv3x3(m, w_up, b_up)
    return content_nchw + up                      # broadcasts over batch


if __name__ == "__main__":
    # Small shapes consistent with the module (vgg_channel -> Cv, inner -> Cin).
    # Cv=128 keeps the kernel output lane-dense (production vgg_channel=512 is too).
    B, Cv, Cin, H, W = 2, 128, 32, 16, 16

    key = jax.random.PRNGKey(0)
    ks = jax.random.split(key, 7)
    content = jax.random.normal(ks[0], (B, Cv, H, W), jnp.float32)
    # Deterministic synthetic parameters (conv weights in HWIO; F1/F2 are the
    # [out,in] 1x1 channel-mix matrices the FilterPredictor would produce).
    w_down = jax.random.normal(ks[1], (3, 3, Cv, Cin), jnp.float32) / jnp.sqrt(9.0 * Cv)
    b_down = jax.random.normal(ks[2], (Cin,), jnp.float32) * 0.1
    filt1 = jax.random.normal(ks[3], (Cin, Cin), jnp.float32) / jnp.sqrt(1.0 * Cin)
    filt2 = jax.random.normal(ks[4], (Cin, Cin), jnp.float32) / jnp.sqrt(1.0 * Cin)
    w_up = jax.random.normal(ks[5], (3, 3, Cin, Cv), jnp.float32) / jnp.sqrt(9.0 * Cin)
    b_up = jax.random.normal(ks[6], (Cv,), jnp.float32) * 0.1
    params = (w_down, b_down, filt1, filt2, w_up, b_up)

    out = jax.block_until_ready(kernel_filter_forward(content, params))
    ref = jax.block_until_ready(_reference(content, params))

    assert out.shape == (B, Cv, H, W), out.shape
    # bf16 matmul operands vs. a HIGHEST-precision f32 reference: documented
    # bf16-level accuracy (estimated max abs err ~2e-2 at these magnitudes).
    max_err = float(jnp.max(jnp.abs(out - ref)))
    assert max_err < 5e-2, f"max abs err {max_err}"
    print("KERNEL_OK")
</pallas_src>

<mosaic_0001>
module attributes {stable_mosaic.version = 11 : i64} {
  func.func @_filter_path_kernel(%arg0: i32, %arg1: memref<256x128xbf16, #tpu.memory_space<vmem>>, %arg2: memref<384x96xbf16, #tpu.memory_space<vmem>>, %arg3: memref<1x32xf32, #tpu.memory_space<vmem>>, %arg4: memref<288x128xbf16, #tpu.memory_space<vmem>>, %arg5: memref<1x128xf32, #tpu.memory_space<vmem>>, %arg6: memref<256x128xf32, #tpu.memory_space<vmem>>) attributes {dimension_semantics = [#tpu.dimension_semantics<arbitrary>], iteration_bounds = array<i64: 1>, scalar_prefetch = 0 : i64, scratch_operands = 0 : i64, tpu.core_type = #tpu.core_type<tc>, window_params = [{pipeline_mode = #tpu.pipeline_mode<synchronous>, transform_indices = @transform_0, window_bounds = array<i64: 256, 128>}, {pipeline_mode = #tpu.pipeline_mode<synchronous>, transform_indices = @transform_1, window_bounds = array<i64: 384, 96>}, {pipeline_mode = #tpu.pipeline_mode<synchronous>, transform_indices = @transform_2, window_bounds = array<i64: 1, 32>}, {pipeline_mode = #tpu.pipeline_mode<synchronous>, transform_indices = @transform_3, window_bounds = array<i64: 288, 128>}, {pipeline_mode = #tpu.pipeline_mode<synchronous>, transform_indices = @transform_4, window_bounds = array<i64: 1, 128>}, {pipeline_mode = #tpu.pipeline_mode<synchronous>, transform_indices = @transform_5, window_bounds = array<i64: 256, 128>}]} {
    %0 = tpu.iota {dimensions = array<i32: 0>} : vector<256x1xi32>
    %c16_i32 = arith.constant 16 : i32
    %c0_i32 = arith.constant 0 : i32
    %1 = arith.cmpi eq, %c16_i32, %c0_i32 : i32
    %c1_i32 = arith.constant 1 : i32
    %2 = arith.select %1, %c1_i32, %c16_i32 : i32
    %3 = vector.broadcast %2 : i32 to vector<256x1xi32>
    %4 = arith.remsi %0, %3 : vector<256x1xi32>
    %c0_i32_0 = arith.constant 0 : i32
    %5 = vector.broadcast %c0_i32_0 : i32 to vector<256x1xi32>
    %6 = arith.cmpi ne, %4, %5 : vector<256x1xi32>
    %c0_i32_1 = arith.constant 0 : i32
    %7 = vector.broadcast %c0_i32_1 : i32 to vector<256x1xi32>
    %8 = arith.cmpi slt, %4, %7 : vector<256x1xi32>
    %c0_i32_2 = arith.constant 0 : i32
    %9 = arith.cmpi slt, %2, %c0_i32_2 : i32
    %10 = vector.broadcast %9 : i1 to vector<256x1xi1>
    %11 = vector.broadcast %10 : vector<256x1xi1> to vector<256x1xi1>
    %12 = arith.xori %8, %11 : vector<256x1xi1>
    %13 = arith.andi %12, %6 : vector<256x1xi1>
    %14 = vector.broadcast %2 : i32 to vector<256x1xi32>
    %15 = arith.addi %4, %14 : vector<256x1xi32>
    %16 = arith.select %13, %15, %4 : vector<256x1xi1>, vector<256x1xi32>
    %c1_i32_3 = arith.constant 1 : i32
    %17 = vector.broadcast %c1_i32_3 : i32 to vector<256x1xi32>
    %18 = arith.cmpi sge, %16, %17 : vector<256x1xi32>
    %c14_i32 = arith.constant 14 : i32
    %19 = vector.broadcast %c14_i32 : i32 to vector<256x1xi32>
    %20 = arith.cmpi sle, %16, %19 : vector<256x1xi32>
    %c0 = arith.constant 0 : index
    %c0_4 = arith.constant 0 : index
    %21 = vector.load %arg1[%c0, %c0_4] : memref<256x128xbf16, #tpu.memory_space<vmem>>, vector<256x128xbf16>
    %22 = arith.extf %21 : vector<256x128xbf16> to vector<256x128xf32>
    %c1_i32_5 = arith.constant 1 : i32
    %23 = tpu.dynamic_rotate %22 by %c1_i32_5 dim 0 : vector<256x128xf32>, i32 -> vector<256x128xf32>
    %cst = arith.constant 0.000000e+00 : f32
    %24 = vector.shape_cast %18 : vector<256x1xi1> to vector<256x1xi1>
    %25 = vector.broadcast %24 : vector<256x1xi1> to vector<256x128xi1>
    %26 = vector.broadcast %cst : f32 to vector<256x128xf32>
    %27 = arith.select %25, %23, %26 : vector<256x128xi1>, vector<256x128xf32>
    %c255_i32 = arith.constant 255 : i32
    %28 = tpu.dynamic_rotate %22 by %c255_i32 dim 0 : vector<256x128xf32>, i32 -> vector<256x128xf32>
    %cst_6 = arith.constant 0.000000e+00 : f32
    %29 = vector.shape_cast %20 : vector<256x1xi1> to vector<256x1xi1>
    %30 = vector.broadcast %29 : vector<256x1xi1> to vector<256x128xi1>
    %31 = vector.broadcast %cst_6 : f32 to vector<256x128xf32>
    %32 = arith.select %30, %28, %31 : vector<256x128xi1>, vector<256x128xf32>
    %33 = tpu.concatenate %27, %22, %32 in 1 : vector<256x128xf32>, vector<256x128xf32>, vector<256x128xf32> -> vector<256x384xf32>
    %34 = arith.truncf %33 : vector<256x384xf32> to vector<256x384xbf16>
    %c0_7 = arith.constant 0 : index
    %c0_8 = arith.constant 0 : index
    %35 = vector.load %arg2[%c0_7, %c0_8] : memref<384x96xbf16, #tpu.memory_space<vmem>>, vector<384x96xbf16>
    %cst_9 = arith.constant dense<0.000000e+00> : vector<256x96xf32>
    %36 = tpu.matmul %34, %35, %cst_9 {dimension_numbers = #tpu.dot_dimension_numbers<[1], [0], [0], [1], [0, 0, 1, 1], [], []>} : vector<256x384xbf16>, vector<384x96xbf16>, vector<256x96xf32> -> vector<256x96xf32>
    %37 = vector.extract_strided_slice %36 {offsets = [0, 0], sizes = [256, 32], strides = [1, 1]} : vector<256x96xf32> to vector<256x32xf32>
    %38 = vector.extract_strided_slice %36 {offsets = [0, 32], sizes = [256, 32], strides = [1, 1]} : vector<256x96xf32> to vector<256x32xf32>
    %39 = vector.extract_strided_slice %36 {offsets = [0, 64], sizes = [256, 32], strides = [1, 1]} : vector<256x96xf32> to vector<256x32xf32>
    %cst_10 = arith.constant 0.000000e+00 : f32
    %40 = vector.broadcast %cst_10 : f32 to vector<16x32xf32>
    %41 = vector.extract_strided_slice %37 {offsets = [0, 0], sizes = [240, 32], strides = [1, 1]} : vector<256x32xf32> to vector<240x32xf32>
    %42 = tpu.concatenate %40, %41 in 0 : vector<16x32xf32>, vector<240x32xf32> -> vector<256x32xf32>
    %43 = arith.addf %38, %42 : vector<256x32xf32>
    %44 = vector.extract_strided_slice %39 {offsets = [16, 0], sizes = [240, 32], strides = [1, 1]} : vector<256x32xf32> to vector<240x32xf32>
    %45 = tpu.concatenate %44, %40 in 0 : vector<240x32xf32>, vector<16x32xf32> -> vector<256x32xf32>
    %46 = arith.addf %43, %45 : vector<256x32xf32>
    %c0_11 = arith.constant 0 : index
    %c0_12 = arith.constant 0 : index
    %47 = vector.load %arg3[%c0_11, %c0_12] : memref<1x32xf32, #tpu.memory_space<vmem>>, vector<1x32xf32>
    %48 = vector.broadcast %47 : vector<1x32xf32> to vector<256x32xf32>
    %49 = arith.addf %46, %48 : vector<256x32xf32>
    %cst_13 = arith.constant 2.000000e-01 : f32
    %50 = vector.broadcast %cst_13 : f32 to vector<256x32xf32>
    %51 = arith.mulf %50, %49 : vector<256x32xf32>
    %52 = arith.maximumf %49, %51 : vector<256x32xf32>
    %c1_i32_14 = arith.constant 1 : i32
    %53 = tpu.dynamic_rotate %52 by %c1_i32_14 dim 0 : vector<256x32xf32>, i32 -> vector<256x32xf32>
    %cst_15 = arith.constant 0.000000e+00 : f32
    %54 = vector.shape_cast %18 : vector<256x1xi1> to vector<256x1xi1>
    %55 = vector.broadcast %54 : vector<256x1xi1> to vector<256x32xi1>
    %56 = vector.broadcast %cst_15 : f32 to vector<256x32xf32>
    %57 = arith.select %55, %53, %56 : vector<256x32xi1>, vector<256x32xf32>
    %c255_i32_16 = arith.constant 255 : i32
    %58 = tpu.dynamic_rotate %52 by %c255_i32_16 dim 0 : vector<256x32xf32>, i32 -> vector<256x32xf32>
    %cst_17 = arith.constant 0.000000e+00 : f32
    %59 = vector.shape_cast %20 : vector<256x1xi1> to vector<256x1xi1>
    %60 = vector.broadcast %59 : vector<256x1xi1> to vector<256x32xi1>
    %61 = vector.broadcast %cst_17 : f32 to vector<256x32xf32>
    %62 = arith.select %60, %58, %61 : vector<256x32xi1>, vector<256x32xf32>
    %63 = tpu.concatenate %57, %52, %62 in 1 : vector<256x32xf32>, vector<256x32xf32>, vector<256x32xf32> -> vector<256x96xf32>
    %64 = arith.truncf %63 : vector<256x96xf32> to vector<256x96xbf16>
    %cst_18 = arith.constant 0.000000e+00 : bf16
    %65 = vector.broadcast %cst_18 : bf16 to vector<16x96xbf16>
    %66 = vector.extract_strided_slice %64 {offsets = [0, 0], sizes = [240, 96], strides = [1, 1]} : vector<256x96xbf16> to vector<240x96xbf16>
    %67 = tpu.concatenate %65, %66 in 0 : vector<16x96xbf16>, vector<240x96xbf16> -> vector<256x96xbf16>
    %68 = vector.extract_strided_slice %64 {offsets = [16, 0], sizes = [240, 96], strides = [1, 1]} : vector<256x96xbf16> to vector<240x96xbf16>
    %69 = tpu.concatenate %68, %65 in 0 : vector<240x96xbf16>, vector<16x96xbf16> -> vector<256x96xbf16>
    %70 = tpu.concatenate %67, %64, %69 in 1 : vector<256x96xbf16>, vector<256x96xbf16>, vector<256x96xbf16> -> vector<256x288xbf16>
    %c0_19 = arith.constant 0 : index
    %c0_20 = arith.constant 0 : index
    %71 = vector.load %arg4[%c0_19, %c0_20] : memref<288x128xbf16, #tpu.memory_space<vmem>>, vector<288x128xbf16>
    %cst_21 = arith.constant dense<0.000000e+00> : vector<256x128xf32>
    %72 = tpu.matmul %70, %71, %cst_21 {dimension_numbers = #tpu.dot_dimension_numbers<[1], [0], [0], [1], [0, 0, 1, 1], [], []>} : vector<256x288xbf16>, vector<288x128xbf16>, vector<256x128xf32> -> vector<256x128xf32>
    %c0_22 = arith.constant 0 : index
    %c0_23 = arith.constant 0 : index
    %73 = vector.load %arg5[%c0_22, %c0_23] : memref<1x128xf32, #tpu.memory_space<vmem>>, vector<1x128xf32>
    %74 = vector.broadcast %73 : vector<1x128xf32> to vector<256x128xf32>
    %75 = arith.addf %72, %74 : vector<256x128xf32>
    %c0_24 = arith.constant 0 : index
    %c0_25 = arith.constant 0 : index
    %76 = vector.load %arg6[%c0_24, %c0_25] : memref<256x128xf32, #tpu.memory_space<vmem>>, vector<256x128xf32>
    tpu.vector_store %arg6[%c0_24, %c0_25], %75 {strides = array<i32>} : memref<256x128xf32, #tpu.memory_space<vmem>>, vector<256x128xf32>,
    return
  }
  func.func @transform_0(%arg0: i32) -> (i32, i32) {
    %c0_i32 = arith.constant 0 : i32
    %c0_i32_0 = arith.constant 0 : i32
    %c0_i32_1 = arith.constant 0 : i32
    return %c0_i32, %c0_i32_0 : i32, i32
  }
  func.func @transform_1(%arg0: i32) -> (i32, i32) {
    %c0_i32 = arith.constant 0 : i32
    %c0_i32_0 = arith.constant 0 : i32
    %c0_i32_1 = arith.constant 0 : i32
    return %c0_i32, %c0_i32_0 : i32, i32
  }
  func.func @transform_2(%arg0: i32) -> (i32, i32) {
    %c0_i32 = arith.constant 0 : i32
    %c0_i32_0 = arith.constant 0 : i32
    %c0_i32_1 = arith.constant 0 : i32
    return %c0_i32, %c0_i32_0 : i32, i32
  }
  func.func @transform_3(%arg0: i32) -> (i32, i32) {
    %c0_i32 = arith.constant 0 : i32
    %c0_i32_0 = arith.constant 0 : i32
    %c0_i32_1 = arith.constant 0 : i32
    return %c0_i32, %c0_i32_0 : i32, i32
  }
  func.func @transform_4(%arg0: i32) -> (i32, i32) {
    %c0_i32 = arith.constant 0 : i32
    %c0_i32_0 = arith.constant 0 : i32
    %c0_i32_1 = arith.constant 0 : i32
    return %c0_i32, %c0_i32_0 : i32, i32
  }
  func.func @transform_5(%arg0: i32) -> (i32, i32) {
    %c0_i32 = arith.constant 0 : i32
    %c0_i32_0 = arith.constant 0 : i32
    %c0_i32_1 = arith.constant 0 : i32
    return %c0_i32, %c0_i32_0 : i32, i32
  }
}

</mosaic_0001>

<llo_original>
// kernel: tpu_custom_call.1
$region0: #{tpu_custom_call.1}
  #allocation0 [shape = 'u32[]', space=smem, size = 0x4, offset = 0x4, fixed_abs, tag = 'smem constant byte address 0x4 - core index']
  #allocation1 [shape = 'u32[144,128]{1,0:T(1,128)}', space=vmem, size = 0x12000, scoped, tag = 'internal scratch']
  %s0 = inlined_call_operand.vmem [shape: bf16[256,128], index: 0, kind: input, shape index: {}]
  %s1 = inlined_call_operand.vmem [shape: bf16[384,96], index: 1, kind: input, shape index: {}]
  %s2 = inlined_call_operand.vmem [shape: f32[1,32], index: 2, kind: input, shape index: {}]
  %s3 = inlined_call_operand.vmem [shape: bf16[288,128], index: 3, kind: input, shape index: {}]
  %s4 = inlined_call_operand.vmem [shape: f32[1,128], index: 4, kind: input, shape index: {}]
  %s5 = inlined_call_operand.hbm [shape: f32[256,128], index: 5, kind: output, shape index: {}]
  %s6 = sld [smem:[#allocation0]]
  $region30: #{tpu_custom_call.1} parent=0
    _
  %s8 = ssub.s32 1, %s6
  %s9 = scalar_select 0, %s8, %s6
  $region1: #{tpu_custom_call.1} parent=0
    #allocation2 [shape = 'u8[131072]{0}', space=vmem, size = 0x20000, scoped, tag = 'output window, operand 0, single buffered']
    #allocation3 [shape = 's32[1]{0}', space=sflag, size = 0x4, scoped, tag = 'scoped memory for tpu_custom_call.1']
    %10 = vsyncpa [#allocation3], 0
    // Predicated region
    $region2: #{tpu_custom_call.1} parent=1 // pred_check
      _
    $region3: #{tpu_custom_call.1} parent=1 // pred_check_branch
      %12 = sbr.rel (0) target = $region5
    $region4: #{tpu_custom_call.1} parent=1 // pred_region
      _
    $region5: #{tpu_custom_call.1} parent=1 // pred_fallthru
      _
    // Predicated region
    $region6: #{tpu_custom_call.1} parent=1 // pred_check
      _
    $region7: #{tpu_custom_call.1} parent=1 // pred_check_branch
      %14 = sbr.rel (0) target = $region9
    $region8: #{tpu_custom_call.1} parent=1 // pred_region
      _
    $region9: #{tpu_custom_call.1} parent=1 // pred_fallthru
      _
    // Predicated region
    $region10: #{tpu_custom_call.1} parent=1 // pred_check
      _
    $region11: #{tpu_custom_call.1} parent=1 // pred_check_branch
      %16 = sbr.rel (0) target = $region13
    $region12: #{tpu_custom_call.1} parent=1 // pred_region
      _
    $region13: #{tpu_custom_call.1} parent=1 // pred_fallthru
      _
    // Predicated region
    $region14: #{tpu_custom_call.1} parent=1 // pred_check
      _
    $region15: #{tpu_custom_call.1} parent=1 // pred_check_branch
      %18 = sbr.rel (0) target = $region17
    $region16: #{tpu_custom_call.1} parent=1 // pred_region
      _
    $region17: #{tpu_custom_call.1} parent=1 // pred_fallthru
      _
    // Predicated region
    $region18: #{tpu_custom_call.1} parent=1 // pred_check
      _
    $region19: #{tpu_custom_call.1} parent=1 // pred_check_branch
      %20 = sbr.rel (0) target = $region21
    $region20: #{tpu_custom_call.1} parent=1 // pred_region
      _
    $region21: #{tpu_custom_call.1} parent=1 // pred_fallthru
      _
    %v22 = vlaneseq
    %v23 = vshrl.u32 %v22, 7
    %v24 = vadd.s32 %v23, 8
    %v25 = vadd.s32 %v23, 16
    %v26 = vadd.s32 %v23, 24
    %v27 = vadd.s32 %v23, 32
    %v28 = vadd.s32 %v23, 40
    %v29 = vadd.s32 %v23, 48
    %v30 = vadd.s32 %v23, 56
    %v31 = vadd.s32 %v23, 64
    %v32 = vadd.s32 %v23, 72
    %v33 = vadd.s32 %v23, 80
    %v34 = vadd.s32 %v23, 88
    %v35 = vadd.s32 %v23, 96
    %v36 = vadd.s32 %v23, 104
    %v37 = vadd.s32 %v23, 112
    %v38 = vadd.s32 %v23, 120
    %v39 = vadd.s32 %v23, 128
    %v40 = vadd.s32 %v23, 136
    %v41 = vadd.s32 %v23, 144
    %v42 = vadd.s32 %v23, 152
    %v43 = vadd.s32 %v23, 160
    %v44 = vadd.s32 %v23, 168
    %v45 = vadd.s32 %v23, 176
    %v46 = vadd.s32 %v23, 184
    %v47 = vadd.s32 %v23, 192
    %v48 = vadd.s32 %v23, 200
    %v49 = vadd.s32 %v23, 208
    %v50 = vadd.s32 %v23, 216
    %v51 = vadd.s32 %v23, 224
    %v52 = vadd.s32 %v23, 232
    %v53 = vadd.s32 %v23, 240
    %v54 = vadd.s32 %v23, 248
    %vm55 = vcmp.lt.s32.totalorder %v23, 0
    %v56 = vsub.s32 0, %v23
    %v57 = vsel %vm55, %v56, %v23
    %v58 = vshrl.u32 %v57, 4
    %v59 = vand.u32 %v57, 15
    %v60 = vsub.s32 0, %v59
    %v61 = vsel %vm55, %v60, %v59
    %vm62 = vcmp.lt.s32.totalorder %v24, 0
    %v63 = vsub.s32 0, %v24
    %v64 = vsel %vm62, %v63, %v24
    %v65 = vshrl.u32 %v64, 4
    %v66 = vand.u32 %v64, 15
    %v67 = vsub.s32 0, %v66
    %v68 = vsel %vm62, %v67, %v66
    %vm69 = vcmp.lt.s32.totalorder %v25, 0
    %v70 = vsub.s32 0, %v25
    %v71 = vsel %vm69, %v70, %v25
    %v72 = vshrl.u32 %v71, 4
    %v73 = vand.u32 %v71, 15
    %v74 = vsub.s32 0, %v73
    %v75 = vsel %vm69, %v74, %v73
    %vm76 = vcmp.lt.s32.totalorder %v26, 0
    %v77 = vsub.s32 0, %v26
    %v78 = vsel %vm76, %v77, %v26
    %v79 = vshrl.u32 %v78, 4
    %v80 = vand.u32 %v78, 15
    %v81 = vsub.s32 0, %v80
    %v82 = vsel %vm76, %v81, %v80
    %vm83 = vcmp.lt.s32.totalorder %v27, 0
    %v84 = vsub.s32 0, %v27
    %v85 = vsel %vm83, %v84, %v27
    %v86 = vshrl.u32 %v85, 4
    %v87 = vand.u32 %v85, 15
    %v88 = vsub.s32 0, %v87
    %v89 = vsel %vm83, %v88, %v87
    %vm90 = vcmp.lt.s32.totalorder %v28, 0
    %v91 = vsub.s32 0, %v28
    %v92 = vsel %vm90, %v91, %v28
    %v93 = vshrl.u32 %v92, 4
    %v94 = vand.u32 %v92, 15
    %v95 = vsub.s32 0, %v94
    %v96 = vsel %vm90, %v95, %v94
    %vm97 = vcmp.lt.s32.totalorder %v29, 0
    %v98 = vsub.s32 0, %v29
    %v99 = vsel %vm97, %v98, %v29
    %v100 = vshrl.u32 %v99, 4
    %v101 = vand.u32 %v99, 15
    %v102 = vsub.s32 0, %v101
    %v103 = vsel %vm97, %v102, %v101
    %vm104 = vcmp.lt.s32.totalorder %v30, 0
    %v105 = vsub.s32 0, %v30
    %v106 = vsel %vm104, %v105, %v30
    %v107 = vshrl.u32 %v106, 4
    %v108 = vand.u32 %v106, 15
    %v109 = vsub.s32 0, %v108
    %v110 = vsel %vm104, %v109, %v108
    %vm111 = vcmp.lt.s32.totalorder %v31, 0
    %v112 = vsub.s32 0, %v31
    %v113 = vsel %vm111, %v112, %v31
    %v114 = vshrl.u32 %v113, 4
    %v115 = vand.u32 %v113, 15
    %v116 = vsub.s32 0, %v115
    %v117 = vsel %vm111, %v116, %v115
    %vm118 = vcmp.lt.s32.totalorder %v32, 0
    %v119 = vsub.s32 0, %v32
    %v120 = vsel %vm118, %v119, %v32
    %v121 = vshrl.u32 %v120, 4
    %v122 = vand.u32 %v120, 15
    %v123 = vsub.s32 0, %v122
    %v124 = vsel %vm118, %v123, %v122
    %vm125 = vcmp.lt.s32.totalorder %v33, 0
    %v126 = vsub.s32 0, %v33
    %v127 = vsel %vm125, %v126, %v33
    %v128 = vshrl.u32 %v127, 4
    %v129 = vand.u32 %v127, 15
    %v130 = vsub.s32 0, %v129
    %v131 = vsel %vm125, %v130, %v129
    %vm132 = vcmp.lt.s32.totalorder %v34, 0
    %v133 = vsub.s32 0, %v34
    %v134 = vsel %vm132, %v133, %v34
    %v135 = vshrl.u32 %v134, 4
    %v136 = vand.u32 %v134, 15
    %v137 = vsub.s32 0, %v136
    %v138 = vsel %vm132, %v137, %v136
    %vm139 = vcmp.lt.s32.totalorder %v35, 0
    %v140 = vsub.s32 0, %v35
    %v141 = vsel %vm139, %v140, %v35
    %v142 = vshrl.u32 %v141, 4
    %v143 = vand.u32 %v141, 15
    %v144 = vsub.s32 0, %v143
    %v145 = vsel %vm139, %v144, %v143
    %vm146 = vcmp.lt.s32.totalorder %v36, 0
    %v147 = vsub.s32 0, %v36
    %v148 = vsel %vm146, %v147, %v36
    %v149 = vshrl.u32 %v148, 4
    %v150 = vand.u32 %v148, 15
    %v151 = vsub.s32 0, %v150
    %v152 = vsel %vm146, %v151, %v150
    %vm153 = vcmp.lt.s32.totalorder %v37, 0
    %v154 = vsub.s32 0, %v37
    %v155 = vsel %vm153, %v154, %v37
    %v156 = vshrl.u32 %v155, 4
    %v157 = vand.u32 %v155, 15
    %v158 = vsub.s32 0, %v157
    %v159 = vsel %vm153, %v158, %v157
    %vm160 = vcmp.lt.s32.totalorder %v38, 0
    %v161 = vsub.s32 0, %v38
    %v162 = vsel %vm160, %v161, %v38
    %v163 = vshrl.u32 %v162, 4
    %v164 = vand.u32 %v162, 15
    %v165 = vsub.s32 0, %v164
    %v166 = vsel %vm160, %v165, %v164
    %vm167 = vcmp.lt.s32.totalorder %v39, 0
    %v168 = vsub.s32 0, %v39
    %v169 = vsel %vm167, %v168, %v39
    %v170 = vshrl.u32 %v169, 4
    %v171 = vand.u32 %v169, 15
    %v172 = vsub.s32 0, %v171
    %v173 = vsel %vm167, %v172, %v171
    %vm174 = vcmp.lt.s32.totalorder %v40, 0
    %v175 = vsub.s32 0, %v40
    %v176 = vsel %vm174, %v175, %v40
    %v177 = vshrl.u32 %v176, 4
    %v178 = vand.u32 %v176, 15
    %v179 = vsub.s32 0, %v178
    %v180 = vsel %vm174, %v179, %v178
    %vm181 = vcmp.lt.s32.totalorder %v41, 0
    %v182 = vsub.s32 0, %v41
    %v183 = vsel %vm181, %v182, %v41
    %v184 = vshrl.u32 %v183, 4
    %v185 = vand.u32 %v183, 15
    %v186 = vsub.s32 0, %v185
    %v187 = vsel %vm181, %v186, %v185
    %vm188 = vcmp.lt.s32.totalorder %v42, 0
    %v189 = vsub.s32 0, %v42
    %v190 = vsel %vm188, %v189, %v42
    %v191 = vshrl.u32 %v190, 4
    %v192 = vand.u32 %v190, 15
    %v193 = vsub.s32 0, %v192
    %v194 = vsel %vm188, %v193, %v192
    %vm195 = vcmp.lt.s32.totalorder %v43, 0
    %v196 = vsub.s32 0, %v43
    %v197 = vsel %vm195, %v196, %v43
    %v198 = vshrl.u32 %v197, 4
    %v199 = vand.u32 %v197, 15
    %v200 = vsub.s32 0, %v199
    %v201 = vsel %vm195, %v200, %v199
    %vm202 = vcmp.lt.s32.totalorder %v44, 0
    %v203 = vsub.s32 0, %v44
    %v204 = vsel %vm202, %v203, %v44
    %v205 = vshrl.u32 %v204, 4
    %v206 = vand.u32 %v204, 15
    %v207 = vsub.s32 0, %v206
    %v208 = vsel %vm202, %v207, %v206
    %vm209 = vcmp.lt.s32.totalorder %v45, 0
    %v210 = vsub.s32 0, %v45
    %v211 = vsel %vm209, %v210, %v45
    %v212 = vshrl.u32 %v211, 4
    %v213 = vand.u32 %v211, 15
    %v214 = vsub.s32 0, %v213
    %v215 = vsel %vm209, %v214, %v213
    %vm216 = vcmp.lt.s32.totalorder %v46, 0
    %v217 = vsub.s32 0, %v46
    %v218 = vsel %vm216, %v217, %v46
    %v219 = vshrl.u32 %v218, 4
    %v220 = vand.u32 %v218, 15
    %v221 = vsub.s32 0, %v220
    %v222 = vsel %vm216, %v221, %v220
    %vm223 = vcmp.lt.s32.totalorder %v47, 0
    %v224 = vsub.s32 0, %v47
    %v225 = vsel %vm223, %v224, %v47
    %v226 = vshrl.u32 %v225, 4
    %v227 = vand.u32 %v225, 15
    %v228 = vsub.s32 0, %v227
    %v229 = vsel %vm223, %v228, %v227
    %vm230 = vcmp.lt.s32.totalorder %v48, 0
    %v231 = vsub.s32 0, %v48
    %v232 = vsel %vm230, %v231, %v48
    %v233 = vshrl.u32 %v232, 4
    %v234 = vand.u32 %v232, 15
    %v235 = vsub.s32 0, %v234
    %v236 = vsel %vm230, %v235, %v234
    %vm237 = vcmp.lt.s32.totalorder %v49, 0
    %v238 = vsub.s32 0, %v49
    %v239 = vsel %vm237, %v238, %v49
    %v240 = vshrl.u32 %v239, 4
    %v241 = vand.u32 %v239, 15
    %v242 = vsub.s32 0, %v241
    %v243 = vsel %vm237, %v242, %v241
    %vm244 = vcmp.lt.s32.totalorder %v50, 0
    %v245 = vsub.s32 0, %v50
    %v246 = vsel %vm244, %v245, %v50
    %v247 = vshrl.u32 %v246, 4
    %v248 = vand.u32 %v246, 15
    %v249 = vsub.s32 0, %v248
    %v250 = vsel %vm244, %v249, %v248
    %vm251 = vcmp.lt.s32.totalorder %v51, 0
    %v252 = vsub.s32 0, %v51
    %v253 = vsel %vm251, %v252, %v51
    %v254 = vshrl.u32 %v253, 4
    %v255 = vand.u32 %v253, 15
    %v256 = vsub.s32 0, %v255
    %v257 = vsel %vm251, %v256, %v255
    %vm258 = vcmp.lt.s32.totalorder %v52, 0
    %v259 = vsub.s32 0, %v52
    %v260 = vsel %vm258, %v259, %v52
    %v261 = vshrl.u32 %v260, 4
    %v262 = vand.u32 %v260, 15
    %v263 = vsub.s32 0, %v262
    %v264 = vsel %vm258, %v263, %v262
    %vm265 = vcmp.lt.s32.totalorder %v53, 0
    %v266 = vsub.s32 0, %v53
    %v267 = vsel %vm265, %v266, %v53
    %v268 = vshrl.u32 %v267, 4
    %v269 = vand.u32 %v267, 15
    %v270 = vsub.s32 0, %v269
    %v271 = vsel %vm265, %v270, %v269
    %vm272 = vcmp.lt.s32.totalorder %v54, 0
    %v273 = vsub.s32 0, %v54
    %v274 = vsel %vm272, %v273, %v54
    %v275 = vshrl.u32 %v274, 4
    %v276 = vand.u32 %v274, 15
    %v277 = vsub.s32 0, %v276
    %v278 = vsel %vm272, %v277, %v276
    %vm279 = vcmp.ne.s32.totalorder %v61, 0
    %vm280 = vcmp.ne.s32.totalorder %v68, 0
    %vm281 = vcmp.ne.s32.totalorder %v75, 0
    %vm282 = vcmp.ne.s32.totalorder %v82, 0
    %vm283 = vcmp.ne.s32.totalorder %v89, 0
    %vm284 = vcmp.ne.s32.totalorder %v96, 0
    %vm285 = vcmp.ne.s32.totalorder %v103, 0
    %vm286 = vcmp.ne.s32.totalorder %v110, 0
    %vm287 = vcmp.ne.s32.totalorder %v117, 0
    %vm288 = vcmp.ne.s32.totalorder %v124, 0
    %vm289 = vcmp.ne.s32.totalorder %v131, 0
    %vm290 = vcmp.ne.s32.totalorder %v138, 0
    %vm291 = vcmp.ne.s32.totalorder %v145, 0
    %vm292 = vcmp.ne.s32.totalorder %v152, 0
    %vm293 = vcmp.ne.s32.totalorder %v159, 0
    %vm294 = vcmp.ne.s32.totalorder %v166, 0
    %vm295 = vcmp.ne.s32.totalorder %v173, 0
    %vm296 = vcmp.ne.s32.totalorder %v180, 0
    %vm297 = vcmp.ne.s32.totalorder %v187, 0
    %vm298 = vcmp.ne.s32.totalorder %v194, 0
    %vm299 = vcmp.ne.s32.totalorder %v201, 0
    %vm300 = vcmp.ne.s32.totalorder %v208, 0
    %vm301 = vcmp.ne.s32.totalorder %v215, 0
    %vm302 = vcmp.ne.s32.totalorder %v222, 0
    %vm303 = vcmp.ne.s32.totalorder %v229, 0
    %vm304 = vcmp.ne.s32.totalorder %v236, 0
    %vm305 = vcmp.ne.s32.totalorder %v243, 0
    %vm306 = vcmp.ne.s32.totalorder %v250, 0
    %vm307 = vcmp.ne.s32.totalorder %v257, 0
    %vm308 = vcmp.ne.s32.totalorder %v264, 0
    %vm309 = vcmp.ne.s32.totalorder %v271, 0
    %vm310 = vcmp.ne.s32.totalorder %v278, 0
    %vm311 = vcmp.lt.s32.totalorder %v61, 0
    %vm312 = vcmp.lt.s32.totalorder %v68, 0
    %vm313 = vcmp.lt.s32.totalorder %v75, 0
    %vm314 = vcmp.lt.s32.totalorder %v82, 0
    %vm315 = vcmp.lt.s32.totalorder %v89, 0
    %vm316 = vcmp.lt.s32.totalorder %v96, 0
    %vm317 = vcmp.lt.s32.totalorder %v103, 0
    %vm318 = vcmp.lt.s32.totalorder %v110, 0
    %vm319 = vcmp.lt.s32.totalorder %v117, 0
    %vm320 = vcmp.lt.s32.totalorder %v124, 0
    %vm321 = vcmp.lt.s32.totalorder %v131, 0
    %vm322 = vcmp.lt.s32.totalorder %v138, 0
    %vm323 = vcmp.lt.s32.totalorder %v145, 0
    %vm324 = vcmp.lt.s32.totalorder %v152, 0
    %vm325 = vcmp.lt.s32.totalorder %v159, 0
    %vm326 = vcmp.lt.s32.totalorder %v166, 0
    %vm327 = vcmp.lt.s32.totalorder %v173, 0
    %vm328 = vcmp.lt.s32.totalorder %v180, 0
    %vm329 = vcmp.lt.s32.totalorder %v187, 0
    %vm330 = vcmp.lt.s32.totalorder %v194, 0
    %vm331 = vcmp.lt.s32.totalorder %v201, 0
    %vm332 = vcmp.lt.s32.totalorder %v208, 0
    %vm333 = vcmp.lt.s32.totalorder %v215, 0
    %vm334 = vcmp.lt.s32.totalorder %v222, 0
    %vm335 = vcmp.lt.s32.totalorder %v229, 0
    %vm336 = vcmp.lt.s32.totalorder %v236, 0
    %vm337 = vcmp.lt.s32.totalorder %v243, 0
    %vm338 = vcmp.lt.s32.totalorder %v250, 0
    %vm339 = vcmp.lt.s32.totalorder %v257, 0
    %vm340 = vcmp.lt.s32.totalorder %v264, 0
    %vm341 = vcmp.lt.s32.totalorder %v271, 0
    %vm342 = vcmp.lt.s32.totalorder %v278, 0
    %vm343 = vmand %vm311, %vm279
    %vm344 = vmand %vm312, %vm280
    %vm345 = vmand %vm313, %vm281
    %vm346 = vmand %vm314, %vm282
    %vm347 = vmand %vm315, %vm283
    %vm348 = vmand %vm316, %vm284
    %vm349 = vmand %vm317, %vm285
    %vm350 = vmand %vm318, %vm286
    %vm351 = vmand %vm319, %vm287
    %vm352 = vmand %vm320, %vm288
    %vm353 = vmand %vm321, %vm289
    %vm354 = vmand %vm322, %vm290
    %vm355 = vmand %vm323, %vm291
    %vm356 = vmand %vm324, %vm292
    %vm357 = vmand %vm325, %vm293
    %vm358 = vmand %vm326, %vm294
    %vm359 = vmand %vm327, %vm295
    %vm360 = vmand %vm328, %vm296
    %vm361 = vmand %vm329, %vm297
    %vm362 = vmand %vm330, %vm298
    %vm363 = vmand %vm331, %vm299
    %vm364 = vmand %vm332, %vm300
    %vm365 = vmand %vm333, %vm301
    %vm366 = vmand %vm334, %vm302
    %vm367 = vmand %vm335, %vm303
    %vm368 = vmand %vm336, %vm304
    %vm369 = vmand %vm337, %vm305
    %vm370 = vmand %vm338, %vm306
    %vm371 = vmand %vm339, %vm307
    %vm372 = vmand %vm340, %vm308
    %vm373 = vmand %vm341, %vm309
    %vm374 = vmand %vm342, %vm310
    %v375 = vadd.s32 %v61, 16
    %v376 = vadd.s32 %v68, 16
    %v377 = vadd.s32 %v75, 16
    %v378 = vadd.s32 %v82, 16
    %v379 = vadd.s32 %v89, 16
    %v380 = vadd.s32 %v96, 16
    %v381 = vadd.s32 %v103, 16
    %v382 = vadd.s32 %v110, 16
    %v383 = vadd.s32 %v117, 16
    %v384 = vadd.s32 %v124, 16
    %v385 = vadd.s32 %v131, 16
    %v386 = vadd.s32 %v138, 16
    %v387 = vadd.s32 %v145, 16
    %v388 = vadd.s32 %v152, 16
    %v389 = vadd.s32 %v159, 16
    %v390 = vadd.s32 %v166, 16
    %v391 = vadd.s32 %v173, 16
    %v392 = vadd.s32 %v180, 16
    %v393 = vadd.s32 %v187, 16
    %v394 = vadd.s32 %v194, 16
    %v395 = vadd.s32 %v201, 16
    %v396 = vadd.s32 %v208, 16
    %v397 = vadd.s32 %v215, 16
    %v398 = vadd.s32 %v222, 16
    %v399 = vadd.s32 %v229, 16
    %v400 = vadd.s32 %v236, 16
    %v401 = vadd.s32 %v243, 16
    %v402 = vadd.s32 %v250, 16
    %v403 = vadd.s32 %v257, 16
    %v404 = vadd.s32 %v264, 16
    %v405 = vadd.s32 %v271, 16
    %v406 = vadd.s32 %v278, 16
    %v407 = vsel %vm343, %v375, %v61
    %v408 = vsel %vm344, %v376, %v68
    %v409 = vsel %vm345, %v377, %v75
    %v410 = vsel %vm346, %v378, %v82
    %v411 = vsel %vm347, %v379, %v89
    %v412 = vsel %vm348, %v380, %v96
    %v413 = vsel %vm349, %v381, %v103
    %v414 = vsel %vm350, %v382, %v110
    %v415 = vsel %vm351, %v383, %v117
    %v416 = vsel %vm352, %v384, %v124
    %v417 = vsel %vm353, %v385, %v131
    %v418 = vsel %vm354, %v386, %v138
    %v419 = vsel %vm355, %v387, %v145
    %v420 = vsel %vm356, %v388, %v152
    %v421 = vsel %vm357, %v389, %v159
    %v422 = vsel %vm358, %v390, %v166
    %v423 = vsel %vm359, %v391, %v173
    %v424 = vsel %vm360, %v392, %v180
    %v425 = vsel %vm361, %v393, %v187
    %v426 = vsel %vm362, %v394, %v194
    %v427 = vsel %vm363, %v395, %v201
    %v428 = vsel %vm364, %v396, %v208
    %v429 = vsel %vm365, %v397, %v215
    %v430 = vsel %vm366, %v398, %v222
    %v431 = vsel %vm367, %v399, %v229
    %v432 = vsel %vm368, %v400, %v236
    %v433 = vsel %vm369, %v401, %v243
    %v434 = vsel %vm370, %v402, %v250
    %v435 = vsel %vm371, %v403, %v257
    %v436 = vsel %vm372, %v404, %v264
    %v437 = vsel %vm373, %v405, %v271
    %v438 = vsel %vm374, %v406, %v278
    %vm439 = vcmp.ge.s32.totalorder %v407, 1
    %vm440 = vcmp.ge.s32.totalorder %v408, 1
    %vm441 = vcmp.ge.s32.totalorder %v409, 1
    %vm442 = vcmp.ge.s32.totalorder %v410, 1
    %vm443 = vcmp.ge.s32.totalorder %v411, 1
    %vm444 = vcmp.ge.s32.totalorder %v412, 1
    %vm445 = vcmp.ge.s32.totalorder %v413, 1
    %vm446 = vcmp.ge.s32.totalorder %v414, 1
    %vm447 = vcmp.ge.s32.totalorder %v415, 1
    %vm448 = vcmp.ge.s32.totalorder %v416, 1
    %vm449 = vcmp.ge.s32.totalorder %v417, 1
    %vm450 = vcmp.ge.s32.totalorder %v418, 1
    %vm451 = vcmp.ge.s32.totalorder %v419, 1
    %vm452 = vcmp.ge.s32.totalorder %v420, 1
    %vm453 = vcmp.ge.s32.totalorder %v421, 1
    %vm454 = vcmp.ge.s32.totalorder %v422, 1
    %vm455 = vcmp.ge.s32.totalorder %v423, 1
    %vm456 = vcmp.ge.s32.totalorder %v424, 1
    %vm457 = vcmp.ge.s32.totalorder %v425, 1
    %vm458 = vcmp.ge.s32.totalorder %v426, 1
    %vm459 = vcmp.ge.s32.totalorder %v427, 1
    %vm460 = vcmp.ge.s32.totalorder %v428, 1
    %vm461 = vcmp.ge.s32.totalorder %v429, 1
    %vm462 = vcmp.ge.s32.totalorder %v430, 1
    %vm463 = vcmp.ge.s32.totalorder %v431, 1
    %vm464 = vcmp.ge.s32.totalorder %v432, 1
    %vm465 = vcmp.ge.s32.totalorder %v433, 1
    %vm466 = vcmp.ge.s32.totalorder %v434, 1
    %vm467 = vcmp.ge.s32.totalorder %v435, 1
    %vm468 = vcmp.ge.s32.totalorder %v436, 1
    %vm469 = vcmp.ge.s32.totalorder %v437, 1
    %vm470 = vcmp.ge.s32.totalorder %v438, 1
    %vm471 = vcmp.le.s32.totalorder %v407, 14
    %vm472 = vcmp.le.s32.totalorder %v408, 14
    %vm473 = vcmp.le.s32.totalorder %v409, 14
    %vm474 = vcmp.le.s32.totalorder %v410, 14
    %vm475 = vcmp.le.s32.totalorder %v411, 14
    %vm476 = vcmp.le.s32.totalorder %v412, 14
    %vm477 = vcmp.le.s32.totalorder %v413, 14
    %vm478 = vcmp.le.s32.totalorder %v414, 14
    %vm479 = vcmp.le.s32.totalorder %v415, 14
    %vm480 = vcmp.le.s32.totalorder %v416, 14
    %vm481 = vcmp.le.s32.totalorder %v417, 14
    %vm482 = vcmp.le.s32.totalorder %v418, 14
    %vm483 = vcmp.le.s32.totalorder %v419, 14
    %vm484 = vcmp.le.s32.totalorder %v420, 14
    %vm485 = vcmp.le.s32.totalorder %v421, 14
    %vm486 = vcmp.le.s32.totalorder %v422, 14
    %vm487 = vcmp.le.s32.totalorder %v423, 14
    %vm488 = vcmp.le.s32.totalorder %v424, 14
    %vm489 = vcmp.le.s32.totalorder %v425, 14
    %vm490 = vcmp.le.s32.totalorder %v426, 14
    %vm491 = vcmp.le.s32.totalorder %v427, 14
    %vm492 = vcmp.le.s32.totalorder %v428, 14
    %vm493 = vcmp.le.s32.totalorder %v429, 14
    %vm494 = vcmp.le.s32.totalorder %v430, 14
    %vm495 = vcmp.le.s32.totalorder %v431, 14
    %vm496 = vcmp.le.s32.totalorder %v432, 14
    %vm497 = vcmp.le.s32.totalorder %v433, 14
    %vm498 = vcmp.le.s32.totalorder %v434, 14
    %vm499 = vcmp.le.s32.totalorder %v435, 14
    %vm500 = vcmp.le.s32.totalorder %v436, 14
    %vm501 = vcmp.le.s32.totalorder %v437, 14
    %vm502 = vcmp.le.s32.totalorder %v438, 14
    %v503 = vld [vmem:[%s0] sm:$0xf]
    %v504 = vld [vmem:[%s0 + $0x4] sm:$0xf]
    %v505 = vld [vmem:[%s0 + $0x8] sm:$0xf]
    %v506 = vld [vmem:[%s0 + $0xc] sm:$0xf]
    %v507 = vld [vmem:[%s0 + $0x10] sm:$0xf]
    %v508 = vld [vmem:[%s0 + $0x14] sm:$0xf]
    %v509 = vld [vmem:[%s0 + $0x18] sm:$0xf]
    %v510 = vld [vmem:[%s0 + $0x1c] sm:$0xf]
    %v511 = vld [vmem:[%s0 + $0x20] sm:$0xf]
    %v512 = vld [vmem:[%s0 + $0x24] sm:$0xf]
    %v513 = vld [vmem:[%s0 + $0x28] sm:$0xf]
    %v514 = vld [vmem:[%s0 + $0x2c] sm:$0xf]
    %v515 = vld [vmem:[%s0 + $0x30] sm:$0xf]
    %v516 = vld [vmem:[%s0 + $0x34] sm:$0xf]
    %v517 = vld [vmem:[%s0 + $0x38] sm:$0xf]
    %v518 = vld [vmem:[%s0 + $0x3c] sm:$0xf]
    %v519 = vld [vmem:[%s0 + $0x40] sm:$0xf]
    %v520 = vld [vmem:[%s0 + $0x44] sm:$0xf]
    %v521 = vld [vmem:[%s0 + $0x48] sm:$0xf]
    %v522 = vld [vmem:[%s0 + $0x4c] sm:$0xf]
    %v523 = vld [vmem:[%s0 + $0x50] sm:$0xf]
    %v524 = vld [vmem:[%s0 + $0x54] sm:$0xf]
    %v525 = vld [vmem:[%s0 + $0x58] sm:$0xf]
    %v526 = vld [vmem:[%s0 + $0x5c] sm:$0xf]
    %v527 = vld [vmem:[%s0 + $0x60] sm:$0xf]
    %v528 = vld [vmem:[%s0 + $0x64] sm:$0xf]
    %v529 = vld [vmem:[%s0 + $0x68] sm:$0xf]
    %v530 = vld [vmem:[%s0 + $0x6c] sm:$0xf]
    %v531 = vld [vmem:[%s0 + $0x70] sm:$0xf]
    %v532 = vld [vmem:[%s0 + $0x74] sm:$0xf]
    %v533 = vld [vmem:[%s0 + $0x78] sm:$0xf]
    %v534 = vld [vmem:[%s0 + $0x7c] sm:$0xf]
    %v535 = vunpack.c.l.bf16 %v503
    %v536 = vunpack.c.l.bf16 %v504
    %v537 = vunpack.c.l.bf16 %v505
    %v538 = vunpack.c.l.bf16 %v506
    %v539 = vunpack.c.l.bf16 %v507
    %v540 = vunpack.c.l.bf16 %v508
    %v541 = vunpack.c.l.bf16 %v509
    %v542 = vunpack.c.l.bf16 %v510
    %v543 = vunpack.c.l.bf16 %v511
    %v544 = vunpack.c.l.bf16 %v512
    %v545 = vunpack.c.l.bf16 %v513
    %v546 = vunpack.c.l.bf16 %v514
    %v547 = vunpack.c.l.bf16 %v515
    %v548 = vunpack.c.l.bf16 %v516
    %v549 = vunpack.c.l.bf16 %v517
    %v550 = vunpack.c.l.bf16 %v518
    %v551 = vunpack.c.l.bf16 %v519
    %v552 = vunpack.c.l.bf16 %v520
    %v553 = vunpack.c.l.bf16 %v521
    %v554 = vunpack.c.l.bf16 %v522
    %v555 = vunpack.c.l.bf16 %v523
    %v556 = vunpack.c.l.bf16 %v524
    %v557 = vunpack.c.l.bf16 %v525
    %v558 = vunpack.c.l.bf16 %v526
    %v559 = vunpack.c.l.bf16 %v527
    %v560 = vunpack.c.l.bf16 %v528
    %v561 = vunpack.c.l.bf16 %v529
    %v562 = vunpack.c.l.bf16 %v530
    %v563 = vunpack.c.l.bf16 %v531
    %v564 = vunpack.c.l.bf16 %v532
    %v565 = vunpack.c.l.bf16 %v533
    %v566 = vunpack.c.l.bf16 %v534
    %v567 = vrot.slane %v535, 7
    %v568 = vrot.slane %v536, 7
    %v569 = vrot.slane %v537, 7
    %v570 = vrot.slane %v538, 7
    %v571 = vrot.slane %v539, 7
    %v572 = vrot.slane %v540, 7
    %v573 = vrot.slane %v541, 7
    %v574 = vrot.slane %v542, 7
    %v575 = vrot.slane %v543, 7
    %v576 = vrot.slane %v544, 7
    %v577 = vrot.slane %v545, 7
    %v578 = vrot.slane %v546, 7
    %v579 = vrot.slane %v547, 7
    %v580 = vrot.slane %v548, 7
    %v581 = vrot.slane %v549, 7
    %v582 = vrot.slane %v550, 7
    %v583 = vrot.slane %v551, 7
    %v584 = vrot.slane %v552, 7
    %v585 = vrot.slane %v553, 7
    %v586 = vrot.slane %v554, 7
    %v587 = vrot.slane %v555, 7
    %v588 = vrot.slane %v556, 7
    %v589 = vrot.slane %v557, 7
    %v590 = vrot.slane %v558, 7
    %v591 = vrot.slane %v559, 7
    %v592 = vrot.slane %v560, 7
    %v593 = vrot.slane %v561, 7
    %v594 = vrot.slane %v562, 7
    %v595 = vrot.slane %v563, 7
    %v596 = vrot.slane %v564, 7
    %v597 = vrot.slane %v565, 7
    %v598 = vrot.slane %v566, 7
    %vm599 = vcmp.lt.s32.totalorder %v23, 1
    %v600 = vsel %vm599, %v597, %v598
    %v601 = vsel %vm599, %v596, %v597
    %v602 = vsel %vm599, %v595, %v596
    %v603 = vsel %vm599, %v594, %v595
    %v604 = vsel %vm599, %v593, %v594
    %v605 = vsel %vm599, %v592, %v593
    %v606 = vsel %vm599, %v591, %v592
    %v607 = vsel %vm599, %v590, %v591
    %v608 = vsel %vm599, %v589, %v590
    %v609 = vsel %vm599, %v588, %v589
    %v610 = vsel %vm599, %v587, %v588
    %v611 = vsel %vm599, %v586, %v587
    %v612 = vsel %vm599, %v585, %v586
    %v613 = vsel %vm599, %v584, %v585
    %v614 = vsel %vm599, %v583, %v584
    %v615 = vsel %vm599, %v582, %v583
    %v616 = vsel %vm599, %v581, %v582
    %v617 = vsel %vm599, %v580, %v581
    %v618 = vsel %vm599, %v579, %v580
    %v619 = vsel %vm599, %v578, %v579
    %v620 = vsel %vm599, %v577, %v578
    %v621 = vsel %vm599, %v576, %v577
    %v622 = vsel %vm599, %v575, %v576
    %v623 = vsel %vm599, %v574, %v575
    %v624 = vsel %vm599, %v573, %v574
    %v625 = vsel %vm599, %v572, %v573
    %v626 = vsel %vm599, %v571, %v572
    %v627 = vsel %vm599, %v570, %v571
    %v628 = vsel %vm599, %v569, %v570
    %v629 = vsel %vm599, %v568, %v569
    %v630 = vsel %vm599, %v567, %v568
    %v631 = vsel %vm599, %v598, %v567
    %v632 = vsel %vm439, 1, 0
    %v633 = vsel %vm440, 1, 0
    %v634 = vsel %vm441, 1, 0
    %v635 = vsel %vm442, 1, 0
    %v636 = vsel %vm443, 1, 0
    %v637 = vsel %vm444, 1, 0
    %v638 = vsel %vm445, 1, 0
    %v639 = vsel %vm446, 1, 0
    %v640 = vsel %vm447, 1, 0
    %v641 = vsel %vm448, 1, 0
    %v642 = vsel %vm449, 1, 0
    %v643 = vsel %vm450, 1, 0
    %v644 = vsel %vm451, 1, 0
    %v645 = vsel %vm452, 1, 0
    %v646 = vsel %vm453, 1, 0
    %v647 = vsel %vm454, 1, 0
    %v648 = vsel %vm455, 1, 0
    %v649 = vsel %vm456, 1, 0
    %v650 = vsel %vm457, 1, 0
    %v651 = vsel %vm458, 1, 0
    %v652 = vsel %vm459, 1, 0
    %v653 = vsel %vm460, 1, 0
    %v654 = vsel %vm461, 1, 0
    %v655 = vsel %vm462, 1, 0
    %v656 = vsel %vm463, 1, 0
    %v657 = vsel %vm464, 1, 0
    %v658 = vsel %vm465, 1, 0
    %v659 = vsel %vm466, 1, 0
    %v660 = vsel %vm467, 1, 0
    %v661 = vsel %vm468, 1, 0
    %v662 = vsel %vm469, 1, 0
    %v663 = vsel %vm470, 1, 0
    %vm664 = vcmp.eq.s32.totalorder %v632, 1
    %vm665 = vcmp.eq.s32.totalorder %v633, 1
    %vm666 = vcmp.eq.s32.totalorder %v634, 1
    %vm667 = vcmp.eq.s32.totalorder %v635, 1
    %vm668 = vcmp.eq.s32.totalorder %v636, 1
    %vm669 = vcmp.eq.s32.totalorder %v637, 1
    %vm670 = vcmp.eq.s32.totalorder %v638, 1
    %vm671 = vcmp.eq.s32.totalorder %v639, 1
    %vm672 = vcmp.eq.s32.totalorder %v640, 1
    %vm673 = vcmp.eq.s32.totalorder %v641, 1
    %vm674 = vcmp.eq.s32.totalorder %v642, 1
    %vm675 = vcmp.eq.s32.totalorder %v643, 1
    %vm676 = vcmp.eq.s32.totalorder %v644, 1
    %vm677 = vcmp.eq.s32.totalorder %v645, 1
    %vm678 = vcmp.eq.s32.totalorder %v646, 1
    %vm679 = vcmp.eq.s32.totalorder %v647, 1
    %vm680 = vcmp.eq.s32.totalorder %v648, 1
    %vm681 = vcmp.eq.s32.totalorder %v649, 1
    %vm682 = vcmp.eq.s32.totalorder %v650, 1
    %vm683 = vcmp.eq.s32.totalorder %v651, 1
    %vm684 = vcmp.eq.s32.totalorder %v652, 1
    %vm685 = vcmp.eq.s32.totalorder %v653, 1
    %vm686 = vcmp.eq.s32.totalorder %v654, 1
    %vm687 = vcmp.eq.s32.totalorder %v655, 1
    %vm688 = vcmp.eq.s32.totalorder %v656, 1
    %vm689 = vcmp.eq.s32.totalorder %v657, 1
    %vm690 = vcmp.eq.s32.totalorder %v658, 1
    %vm691 = vcmp.eq.s32.totalorder %v659, 1
    %vm692 = vcmp.eq.s32.totalorder %v660, 1
    %vm693 = vcmp.eq.s32.totalorder %v661, 1
    %vm694 = vcmp.eq.s32.totalorder %v662, 1
    %vm695 = vcmp.eq.s32.totalorder %v663, 1
    %v696 = vsel %vm664, %v631, 0.0
    %v697 = vsel %vm665, %v630, 0.0
    %v698 = vsel %vm666, %v629, 0.0
    %v699 = vsel %vm667, %v628, 0.0
    %v700 = vsel %vm668, %v627, 0.0
    %v701 = vsel %vm669, %v626, 0.0
    %v702 = vsel %vm670, %v625, 0.0
    %v703 = vsel %vm671, %v624, 0.0
    %v704 = vsel %vm672, %v623, 0.0
    %v705 = vsel %vm673, %v622, 0.0
    %v706 = vsel %vm674, %v621, 0.0
    %v707 = vsel %vm675, %v620, 0.0
    %v708 = vsel %vm676, %v619, 0.0
    %v709 = vsel %vm677, %v618, 0.0
    %v710 = vsel %vm678, %v617, 0.0
    %v711 = vsel %vm679, %v616, 0.0
    %v712 = vsel %vm680, %v615, 0.0
    %v713 = vsel %vm681, %v614, 0.0
    %v714 = vsel %vm682, %v613, 0.0
    %v715 = vsel %vm683, %v612, 0.0
    %v716 = vsel %vm684, %v611, 0.0
    %v717 = vsel %vm685, %v610, 0.0
    %v718 = vsel %vm686, %v609, 0.0
    %v719 = vsel %vm687, %v608, 0.0
    %v720 = vsel %vm688, %v607, 0.0
    %v721 = vsel %vm689, %v606, 0.0
    %v722 = vsel %vm690, %v605, 0.0
    %v723 = vsel %vm691, %v604, 0.0
    %v724 = vsel %vm692, %v603, 0.0
    %v725 = vsel %vm693, %v602, 0.0
    %v726 = vsel %vm694, %v601, 0.0
    %v727 = vsel %vm695, %v600, 0.0
    %v728 = vrot.slane %v535, 1
    %v729 = vrot.slane %v536, 1
    %v730 = vrot.slane %v537, 1
    %v731 = vrot.slane %v538, 1
    %v732 = vrot.slane %v539, 1
    %v733 = vrot.slane %v540, 1
    %v734 = vrot.slane %v541, 1
    %v735 = vrot.slane %v542, 1
    %v736 = vrot.slane %v543, 1
    %v737 = vrot.slane %v544, 1
    %v738 = vrot.slane %v545, 1
    %v739 = vrot.slane %v546, 1
    %v740 = vrot.slane %v547, 1
    %v741 = vrot.slane %v548, 1
    %v742 = vrot.slane %v549, 1
    %v743 = vrot.slane %v550, 1
    %v744 = vrot.slane %v551, 1
    %v745 = vrot.slane %v552, 1
    %v746 = vrot.slane %v553, 1
    %v747 = vrot.slane %v554, 1
    %v748 = vrot.slane %v555, 1
    %v749 = vrot.slane %v556, 1
    %v750 = vrot.slane %v557, 1
    %v751 = vrot.slane %v558, 1
    %v752 = vrot.slane %v559, 1
    %v753 = vrot.slane %v560, 1
    %v754 = vrot.slane %v561, 1
    %v755 = vrot.slane %v562, 1
    %v756 = vrot.slane %v563, 1
    %v757 = vrot.slane %v564, 1
    %v758 = vrot.slane %v565, 1
    %v759 = vrot.slane %v566, 1
    %vm760 = vcmp.lt.s32.totalorder %v23, 7
    %v761 = vsel %vm760, %v758, %v759
    %v762 = vsel %vm760, %v757, %v758
    %v763 = vsel %vm760, %v756, %v757
    %v764 = vsel %vm760, %v755, %v756
    %v765 = vsel %vm760, %v754, %v755
    %v766 = vsel %vm760, %v753, %v754
    %v767 = vsel %vm760, %v752, %v753
    %v768 = vsel %vm760, %v751, %v752
    %v769 = vsel %vm760, %v750, %v751
    %v770 = vsel %vm760, %v749, %v750
    %v771 = vsel %vm760, %v748, %v749
    %v772 = vsel %vm760, %v747, %v748
    %v773 = vsel %vm760, %v746, %v747
    %v774 = vsel %vm760, %v745, %v746
    %v775 = vsel %vm760, %v744, %v745
    %v776 = vsel %vm760, %v743, %v744
    %v777 = vsel %vm760, %v742, %v743
    %v778 = vsel %vm760, %v741, %v742
    %v779 = vsel %vm760, %v740, %v741
    %v780 = vsel %vm760, %v739, %v740
    %v781 = vsel %vm760, %v738, %v739
    %v782 = vsel %vm760, %v737, %v738
    %v783 = vsel %vm760, %v736, %v737
    %v784 = vsel %vm760, %v735, %v736
    %v785 = vsel %vm760, %v734, %v735
    %v786 = vsel %vm760, %v733, %v734
    %v787 = vsel %vm760, %v732, %v733
    %v788 = vsel %vm760, %v731, %v732
    %v789 = vsel %vm760, %v730, %v731
    %v790 = vsel %vm760, %v729, %v730
    %v791 = vsel %vm760, %v728, %v729
    %v792 = vsel %vm760, %v759, %v728
    %v793 = vsel %vm471, 1, 0
    %v794 = vsel %vm472, 1, 0
    %v795 = vsel %vm473, 1, 0
    %v796 = vsel %vm474, 1, 0
    %v797 = vsel %vm475, 1, 0
    %v798 = vsel %vm476, 1, 0
    %v799 = vsel %vm477, 1, 0
    %v800 = vsel %vm478, 1, 0
    %v801 = vsel %vm479, 1, 0
    %v802 = vsel %vm480, 1, 0
    %v803 = vsel %vm481, 1, 0
    %v804 = vsel %vm482, 1, 0
    %v805 = vsel %vm483, 1, 0
    %v806 = vsel %vm484, 1, 0
    %v807 = vsel %vm485, 1, 0
    %v808 = vsel %vm486, 1, 0
    %v809 = vsel %vm487, 1, 0
    %v810 = vsel %vm488, 1, 0
    %v811 = vsel %vm489, 1, 0
    %v812 = vsel %vm490, 1, 0
    %v813 = vsel %vm491, 1, 0
    %v814 = vsel %vm492, 1, 0
    %v815 = vsel %vm493, 1, 0
    %v816 = vsel %vm494, 1, 0
    %v817 = vsel %vm495, 1, 0
    %v818 = vsel %vm496, 1, 0
    %v819 = vsel %vm497, 1, 0
    %v820 = vsel %vm498, 1, 0
    %v821 = vsel %vm499, 1, 0
    %v822 = vsel %vm500, 1, 0
    %v823 = vsel %vm501, 1, 0
    %v824 = vsel %vm502, 1, 0
    %vm825 = vcmp.eq.s32.totalorder %v793, 1
    %vm826 = vcmp.eq.s32.totalorder %v794, 1
    %vm827 = vcmp.eq.s32.totalorder %v795, 1
    %vm828 = vcmp.eq.s32.totalorder %v796, 1
    %vm829 = vcmp.eq.s32.totalorder %v797, 1
    %vm830 = vcmp.eq.s32.totalorder %v798, 1
    %vm831 = vcmp.eq.s32.totalorder %v799, 1
    %vm832 = vcmp.eq.s32.totalorder %v800, 1
    %vm833 = vcmp.eq.s32.totalorder %v801, 1
    %vm834 = vcmp.eq.s32.totalorder %v802, 1
    %vm835 = vcmp.eq.s32.totalorder %v803, 1
    %vm836 = vcmp.eq.s32.totalorder %v804, 1
    %vm837 = vcmp.eq.s32.totalorder %v805, 1
    %vm838 = vcmp.eq.s32.totalorder %v806, 1
    %vm839 = vcmp.eq.s32.totalorder %v807, 1
    %vm840 = vcmp.eq.s32.totalorder %v808, 1
    %vm841 = vcmp.eq.s32.totalorder %v809, 1
    %vm842 = vcmp.eq.s32.totalorder %v810, 1
    %vm843 = vcmp.eq.s32.totalorder %v811, 1
    %vm844 = vcmp.eq.s32.totalorder %v812, 1
    %vm845 = vcmp.eq.s32.totalorder %v813, 1
    %vm846 = vcmp.eq.s32.totalorder %v814, 1
    %vm847 = vcmp.eq.s32.totalorder %v815, 1
    %vm848 = vcmp.eq.s32.totalorder %v816, 1
    %vm849 = vcmp.eq.s32.totalorder %v817, 1
    %vm850 = vcmp.eq.s32.totalorder %v818, 1
    %vm851 = vcmp.eq.s32.totalorder %v819, 1
    %vm852 = vcmp.eq.s32.totalorder %v820, 1
    %vm853 = vcmp.eq.s32.totalorder %v821, 1
    %vm854 = vcmp.eq.s32.totalorder %v822, 1
    %vm855 = vcmp.eq.s32.totalorder %v823, 1
    %vm856 = vcmp.eq.s32.totalorder %v824, 1
    %v857 = vsel %vm825, %v791, 0.0
    %v858 = vsel %vm826, %v790, 0.0
    %v859 = vsel %vm827, %v789, 0.0
    %v860 = vsel %vm828, %v788, 0.0
    %v861 = vsel %vm829, %v787, 0.0
    %v862 = vsel %vm830, %v786, 0.0
    %v863 = vsel %vm831, %v785, 0.0
    %v864 = vsel %vm832, %v784, 0.0
    %v865 = vsel %vm833, %v783, 0.0
    %v866 = vsel %vm834, %v782, 0.0
    %v867 = vsel %vm835, %v781, 0.0
    %v868 = vsel %vm836, %v780, 0.0
    %v869 = vsel %vm837, %v779, 0.0
    %v870 = vsel %vm838, %v778, 0.0
    %v871 = vsel %vm839, %v777, 0.0
    %v872 = vsel %vm840, %v776, 0.0
    %v873 = vsel %vm841, %v775, 0.0
    %v874 = vsel %vm842, %v774, 0.0
    %v875 = vsel %vm843, %v773, 0.0
    %v876 = vsel %vm844, %v772, 0.0
    %v877 = vsel %vm845, %v771, 0.0
    %v878 = vsel %vm846, %v770, 0.0
    %v879 = vsel %vm847, %v769, 0.0
    %v880 = vsel %vm848, %v768, 0.0
    %v881 = vsel %vm849, %v767, 0.0
    %v882 = vsel %vm850, %v766, 0.0
    %v883 = vsel %vm851, %v765, 0.0
    %v884 = vsel %vm852, %v764, 0.0
    %v885 = vsel %vm853, %v763, 0.0
    %v886 = vsel %vm854, %v762, 0.0
    %v887 = vsel %vm855, %v761, 0.0
    %v888 = vsel %vm856, %v792, 0.0
    %v889 = vpack.c.bf16 %v697, %v696
    %v890 = vpack.c.bf16 %v536, %v535
    %v891 = vpack.c.bf16 %v858, %v857
    %v892 = vpack.c.bf16 %v699, %v698
    %v893 = vpack.c.bf16 %v538, %v537
    %v894 = vpack.c.bf16 %v860, %v859
    %v895 = vpack.c.bf16 %v701, %v700
    %v896 = vpack.c.bf16 %v540, %v539
    %v897 = vpack.c.bf16 %v862, %v861
    %v898 = vpack.c.bf16 %v703, %v702
    %v899 = vpack.c.bf16 %v542, %v541
    %v900 = vpack.c.bf16 %v864, %v863
    %v901 = vpack.c.bf16 %v705, %v704
    %v902 = vpack.c.bf16 %v544, %v543
    %v903 = vpack.c.bf16 %v866, %v865
    %v904 = vpack.c.bf16 %v707, %v706
    %v905 = vpack.c.bf16 %v546, %v545
    %v906 = vpack.c.bf16 %v868, %v867
    %v907 = vpack.c.bf16 %v709, %v708
    %v908 = vpack.c.bf16 %v548, %v547
    %v909 = vpack.c.bf16 %v870, %v869
    %v910 = vpack.c.bf16 %v711, %v710
    %v911 = vpack.c.bf16 %v550, %v549
    %v912 = vpack.c.bf16 %v872, %v871
    %v913 = vpack.c.bf16 %v713, %v712
    %v914 = vpack.c.bf16 %v552, %v551
    %v915 = vpack.c.bf16 %v874, %v873
    %v916 = vpack.c.bf16 %v715, %v714
    %v917 = vpack.c.bf16 %v554, %v553
    %v918 = vpack.c.bf16 %v876, %v875
    %v919 = vpack.c.bf16 %v717, %v716
    %v920 = vpack.c.bf16 %v556, %v555
    %v921 = vpack.c.bf16 %v878, %v877
    %v922 = vpack.c.bf16 %v719, %v718
    %v923 = vpack.c.bf16 %v558, %v557
    %v924 = vpack.c.bf16 %v880, %v879
    %v925 = vpack.c.bf16 %v721, %v720
    %v926 = vpack.c.bf16 %v560, %v559
    %v927 = vpack.c.bf16 %v882, %v881
    %v928 = vpack.c.bf16 %v723, %v722
    %v929 = vpack.c.bf16 %v562, %v561
    %v930 = vpack.c.bf16 %v884, %v883
    %v931 = vpack.c.bf16 %v725, %v724
    %v932 = vpack.c.bf16 %v564, %v563
    %v933 = vpack.c.bf16 %v886, %v885
    %v934 = vpack.c.bf16 %v727, %v726
    %v935 = vpack.c.bf16 %v566, %v565
    %v936 = vpack.c.bf16 %v888, %v887
    %v937 = vld [vmem:[%s1] sm:$0xf]
    %v938 = vld [vmem:[%s1 + $0x4] sm:$0xf]
    %v939 = vld [vmem:[%s1 + $0x8] sm:$0xf]
    %v940 = vld [vmem:[%s1 + $0xc] sm:$0xf]
    %v941 = vld [vmem:[%s1 + $0x10] sm:$0xf]
    %v942 = vld [vmem:[%s1 + $0x14] sm:$0xf]
    %v943 = vld [vmem:[%s1 + $0x18] sm:$0xf]
    %v944 = vld [vmem:[%s1 + $0x1c] sm:$0xf]
    %v945 = vld [vmem:[%s1 + $0x20] sm:$0xf]
    %v946 = vld [vmem:[%s1 + $0x24] sm:$0xf]
    %v947 = vld [vmem:[%s1 + $0x28] sm:$0xf]
    %v948 = vld [vmem:[%s1 + $0x2c] sm:$0xf]
    %v949 = vld [vmem:[%s1 + $0x30] sm:$0xf]
    %v950 = vld [vmem:[%s1 + $0x34] sm:$0xf]
    %v951 = vld [vmem:[%s1 + $0x38] sm:$0xf]
    %v952 = vld [vmem:[%s1 + $0x3c] sm:$0xf]
    %v953 = vld [vmem:[%s1 + $0x40] sm:$0xf]
    %v954 = vld [vmem:[%s1 + $0x44] sm:$0xf]
    %v955 = vld [vmem:[%s1 + $0x48] sm:$0xf]
    %v956 = vld [vmem:[%s1 + $0x4c] sm:$0xf]
    %v957 = vld [vmem:[%s1 + $0x50] sm:$0xf]
    %v958 = vld [vmem:[%s1 + $0x54] sm:$0xf]
    %v959 = vld [vmem:[%s1 + $0x58] sm:$0xf]
    %v960 = vld [vmem:[%s1 + $0x5c] sm:$0xf]
    %v961 = vld [vmem:[%s1 + $0x60] sm:$0xf]
    %v962 = vld [vmem:[%s1 + $0x64] sm:$0xf]
    %v963 = vld [vmem:[%s1 + $0x68] sm:$0xf]
    %v964 = vld [vmem:[%s1 + $0x6c] sm:$0xf]
    %v965 = vld [vmem:[%s1 + $0x70] sm:$0xf]
    %v966 = vld [vmem:[%s1 + $0x74] sm:$0xf]
    %v967 = vld [vmem:[%s1 + $0x78] sm:$0xf]
    %v968 = vld [vmem:[%s1 + $0x7c] sm:$0xf]
    %v969 = vld [vmem:[%s1 + $0x80] sm:$0xf]
    %v970 = vld [vmem:[%s1 + $0x84] sm:$0xf]
    %v971 = vld [vmem:[%s1 + $0x88] sm:$0xf]
    %v972 = vld [vmem:[%s1 + $0x8c] sm:$0xf]
    %v973 = vld [vmem:[%s1 + $0x90] sm:$0xf]
    %v974 = vld [vmem:[%s1 + $0x94] sm:$0xf]
    %v975 = vld [vmem:[%s1 + $0x98] sm:$0xf]
    %v976 = vld [vmem:[%s1 + $0x9c] sm:$0xf]
    %v977 = vld [vmem:[%s1 + $0xa0] sm:$0xf]
    %v978 = vld [vmem:[%s1 + $0xa4] sm:$0xf]
    %v979 = vld [vmem:[%s1 + $0xa8] sm:$0xf]
    %v980 = vld [vmem:[%s1 + $0xac] sm:$0xf]
    %v981 = vld [vmem:[%s1 + $0xb0] sm:$0xf]
    %v982 = vld [vmem:[%s1 + $0xb4] sm:$0xf]
    %v983 = vld [vmem:[%s1 + $0xb8] sm:$0xf]
    %v984 = vld [vmem:[%s1 + $0xbc] sm:$0xf]
    %v1033 = vunpack.c.l.b16 %v937
    %v1034 = vunpack.c.l.b16 %v938
    %v1035 = vunpack.c.l.b16 %v939
    %v1036 = vunpack.c.l.b16 %v940
    %v1037 = vunpack.c.l.b16 %v941
    %v1038 = vunpack.c.l.b16 %v942
    %v1039 = vunpack.c.l.b16 %v943
    %v1040 = vunpack.c.l.b16 %v944
    %v1041 = vunpack.c.l.b16 %v945
    %v1042 = vunpack.c.l.b16 %v946
    %v1043 = vunpack.c.l.b16 %v947
    %v1044 = vunpack.c.l.b16 %v948
    %v1045 = vunpack.c.l.b16 %v949
    %v1046 = vunpack.c.l.b16 %v950
    %v1047 = vunpack.c.l.b16 %v951
    %v1048 = vunpack.c.l.b16 %v952
    %v1049 = vunpack.c.l.b16 %v953
    %v1050 = vunpack.c.l.b16 %v954
    %v1051 = vunpack.c.l.b16 %v955
    %v1052 = vunpack.c.l.b16 %v956
    %v1053 = vunpack.c.l.b16 %v957
    %v1054 = vunpack.c.l.b16 %v958
    %v1055 = vunpack.c.l.b16 %v959
    %v1056 = vunpack.c.l.b16 %v960
    %v1057 = vunpack.c.l.b16 %v961
    %v1058 = vunpack.c.l.b16 %v962
    %v1059 = vunpack.c.l.b16 %v963
    %v1060 = vunpack.c.l.b16 %v964
    %v1061 = vunpack.c.l.b16 %v965
    %v1062 = vunpack.c.l.b16 %v966
    %v1063 = vunpack.c.l.b16 %v967
    %v1064 = vunpack.c.l.b16 %v968
    %v1065 = vunpack.c.l.b16 %v969
    %v1066 = vunpack.c.l.b16 %v970
    %v1067 = vunpack.c.l.b16 %v971
    %v1068 = vunpack.c.l.b16 %v972
    %v1069 = vunpack.c.l.b16 %v973
    %v1070 = vunpack.c.l.b16 %v974
    %v1071 = vunpack.c.l.b16 %v975
    %v1072 = vunpack.c.l.b16 %v976
    %v1073 = vunpack.c.l.b16 %v977
    %v1074 = vunpack.c.l.b16 %v978
    %v1075 = vunpack.c.l.b16 %v979
    %v1076 = vunpack.c.l.b16 %v980
    %v1077 = vunpack.c.l.b16 %v981
    %v1078 = vunpack.c.l.b16 %v982
    %v1079 = vunpack.c.l.b16 %v983
    %v1080 = vunpack.c.l.b16 %v984
    %v1081 = vpack.c.b16 %v1034, %v1033
    %v1082 = vpack.c.b16 %v1036, %v1035
    %v1083 = vpack.c.b16 %v1038, %v1037
    %v1084 = vpack.c.b16 %v1040, %v1039
    %v1085 = vpack.c.b16 %v1042, %v1041
    %v1086 = vpack.c.b16 %v1044, %v1043
    %v1087 = vpack.c.b16 %v1046, %v1045
    %v1088 = vpack.c.b16 %v1048, %v1047
    %v1089 = vpack.c.b16 %v1050, %v1049
    %v1090 = vpack.c.b16 %v1052, %v1051
    %v1091 = vpack.c.b16 %v1054, %v1053
    %v1092 = vpack.c.b16 %v1056, %v1055
    %v1093 = vpack.c.b16 %v1058, %v1057
    %v1094 = vpack.c.b16 %v1060, %v1059
    %v1095 = vpack.c.b16 %v1062, %v1061
    %v1096 = vpack.c.b16 %v1064, %v1063
    %v1097 = vpack.c.b16 %v1066, %v1065
    %v1098 = vpack.c.b16 %v1068, %v1067
    %v1099 = vpack.c.b16 %v1070, %v1069
    %v1100 = vpack.c.b16 %v1072, %v1071
    %v1101 = vpack.c.b16 %v1074, %v1073
    %v1102 = vpack.c.b16 %v1076, %v1075
    %v1103 = vpack.c.b16 %v1078, %v1077
    %v1104 = vpack.c.b16 %v1080, %v1079
    %1129 = vmatprep.subr.bf16.mxu0 0
    %1130 = vmatpush1.bf16.msra.mxu0 %v1088
    %1131 = vmatprep.subr.bf16.mxu0 0
    %1132 = vmatpush1.bf16.msra.mxu0 %v1087
    %1133 = vmatprep.subr.bf16.mxu0 0
    %1134 = vmatpush1.bf16.msra.mxu0 %v1086
    %1135 = vmatprep.subr.bf16.mxu0 0
    %1136 = vmatpush1.bf16.msra.mxu0 %v1085
    %1137 = vmatprep.subr.bf16.mxu0 0
    %1138 = vmatpush1.bf16.msra.mxu0 %v1084
    %1139 = vmatprep.subr.bf16.mxu0 0
    %1140 = vmatpush1.bf16.msra.mxu0 %v1083
    %1141 = vmatprep.subr.bf16.mxu0 0
    %1142 = vmatpush1.bf16.msra.mxu0 %v1082
    %1143 = vmatprep.subr.bf16.mxu0 0
    %1144 = vmatpush1.bf16.msra.mxu0 %v1081
    %1145 = vmatprep.subr.bf16.mxu0 0
    %1146 = vmatpush2.bf16.msra.mxu0 %v1096
    %1147 = vmatprep.subr.bf16.mxu0 0
    %1148 = vmatpush2.bf16.msra.mxu0 %v1095
    %1149 = vmatprep.subr.bf16.mxu0 0
    %1150 = vmatpush2.bf16.msra.mxu0 %v1094
    %1151 = vmatprep.subr.bf16.mxu0 0
    %1152 = vmatpush2.bf16.msra.mxu0 %v1093
    %1153 = vmatprep.subr.bf16.mxu0 0
    %1154 = vmatpush2.bf16.msra.mxu0 %v1092
    %1155 = vmatprep.subr.bf16.mxu0 0
    %1156 = vmatpush2.bf16.msra.mxu0 %v1091
    %1157 = vmatprep.subr.bf16.mxu0 0
    %1158 = vmatpush2.bf16.msra.mxu0 %v1090
    %1159 = vmatprep.subr.bf16.mxu0 0
    %1160 = vmatpush2.bf16.msra.mxu0 %v1089
    %1161 = vmatprep.mubr.bf16.mxu0 %v890
    %1162 = vmatmul.mubr.bf16.gmra.mxu0 %v889
    %v1163 = vpop.f32.mrf.mxu0
    %v1164 = vadd.f32 0.0, %v1163
    %v1165 = vpop.f32.mrf.mxu0
    %v1166 = vpop.f32.mrf.mxu0
    %v1167 = vadd.f32 0.0, %v1166
    %v1168 = vpop.f32.mrf.mxu0
    %1169 = vmatprep.mubr.bf16.mxu0 %v893
    %1170 = vmatmul.mubr.bf16.gmra.mxu0 %v892
    %v1171 = vpop.f32.mrf.mxu0
    %v1172 = vadd.f32 0.0, %v1171
    %v1173 = vpop.f32.mrf.mxu0
    %v1174 = vpop.f32.mrf.mxu0
    %v1175 = vadd.f32 0.0, %v1174
    %v1176 = vpop.f32.mrf.mxu0
    %1177 = vmatprep.mubr.bf16.mxu0 %v896
    %1178 = vmatmul.mubr.bf16.gmra.mxu0 %v895
    %v1179 = vpop.f32.mrf.mxu0
    %v1180 = vadd.f32 0.0, %v1179
    %v1181 = vpop.f32.mrf.mxu0
    %v1182 = vpop.f32.mrf.mxu0
    %v1183 = vadd.f32 0.0, %v1182
    %v1184 = vpop.f32.mrf.mxu0
    %1185 = vmatprep.mubr.bf16.mxu0 %v899
    %1186 = vmatmul.mubr.bf16.gmra.mxu0 %v898
    %v1187 = vpop.f32.mrf.mxu0
    %v1188 = vadd.f32 0.0, %v1187
    %v1189 = vpop.f32.mrf.mxu0
    %v1190 = vpop.f32.mrf.mxu0
    %v1191 = vadd.f32 0.0, %v1190
    %v1192 = vpop.f32.mrf.mxu0
    %1193 = vmatprep.mubr.bf16.mxu0 %v902
    %1194 = vmatmul.mubr.bf16.gmra.mxu0 %v901
    %v1195 = vpop.f32.mrf.mxu0
    %v1196 = vadd.f32 0.0, %v1195
    %v1197 = vpop.f32.mrf.mxu0
    %v1198 = vpop.f32.mrf.mxu0
    %v1199 = vadd.f32 0.0, %v1198
    %v1200 = vpop.f32.mrf.mxu0
    %1201 = vmatprep.mubr.bf16.mxu0 %v905
    %1202 = vmatmul.mubr.bf16.gmra.mxu0 %v904
    %v1203 = vpop.f32.mrf.mxu0
    %v1204 = vadd.f32 0.0, %v1203
    %v1205 = vpop.f32.mrf.mxu0
    %v1206 = vpop.f32.mrf.mxu0
    %v1207 = vadd.f32 0.0, %v1206
    %v1208 = vpop.f32.mrf.mxu0
    %1209 = vmatprep.mubr.bf16.mxu0 %v908
    %1210 = vmatmul.mubr.bf16.gmra.mxu0 %v907
    %v1211 = vpop.f32.mrf.mxu0
    %v1212 = vadd.f32 0.0, %v1211
    %v1213 = vpop.f32.mrf.mxu0
    %v1214 = vpop.f32.mrf.mxu0
    %v1215 = vadd.f32 0.0, %v1214
    %v1216 = vpop.f32.mrf.mxu0
    %1217 = vmatprep.mubr.bf16.mxu0 %v911
    %1218 = vmatmul.mubr.bf16.gmra.mxu0 %v910
    %v1219 = vpop.f32.mrf.mxu0
    %v1220 = vadd.f32 0.0, %v1219
    %v1221 = vpop.f32.mrf.mxu0
    %v1222 = vpop.f32.mrf.mxu0
    %v1223 = vadd.f32 0.0, %v1222
    %v1224 = vpop.f32.mrf.mxu0
    %1225 = vmatprep.mubr.bf16.mxu0 %v914
    %1226 = vmatmul.mubr.bf16.gmra.mxu0 %v913
    %v1227 = vpop.f32.mrf.mxu0
    %v1228 = vadd.f32 0.0, %v1227
    %v1229 = vpop.f32.mrf.mxu0
    %v1230 = vpop.f32.mrf.mxu0
    %v1231 = vadd.f32 0.0, %v1230
    %v1232 = vpop.f32.mrf.mxu0
    %1233 = vmatprep.mubr.bf16.mxu0 %v917
    %1234 = vmatmul.mubr.bf16.gmra.mxu0 %v916
    %v1235 = vpop.f32.mrf.mxu0
    %v1236 = vadd.f32 0.0, %v1235
    %v1237 = vpop.f32.mrf.mxu0
    %v1238 = vpop.f32.mrf.mxu0
    %v1239 = vadd.f32 0.0, %v1238
    %v1240 = vpop.f32.mrf.mxu0
    %1241 = vmatprep.mubr.bf16.mxu0 %v920
    %1242 = vmatmul.mubr.bf16.gmra.mxu0 %v919
    %v1243 = vpop.f32.mrf.mxu0
    %v1244 = vadd.f32 0.0, %v1243
    %v1245 = vpop.f32.mrf.mxu0
    %v1246 = vpop.f32.mrf.mxu0
    %v1247 = vadd.f32 0.0, %v1246
    %v1248 = vpop.f32.mrf.mxu0
    %1249 = vmatprep.mubr.bf16.mxu0 %v923
    %1250 = vmatmul.mubr.bf16.gmra.mxu0 %v922
    %v1251 = vpop.f32.mrf.mxu0
    %v1252 = vadd.f32 0.0, %v1251
    %v1253 = vpop.f32.mrf.mxu0
    %v1254 = vpop.f32.mrf.mxu0
    %v1255 = vadd.f32 0.0, %v1254
    %v1256 = vpop.f32.mrf.mxu0
    %1257 = vmatprep.mubr.bf16.mxu0 %v926
    %1258 = vmatmul.mubr.bf16.gmra.mxu0 %v925
    %v1259 = vpop.f32.mrf.mxu0
    %v1260 = vadd.f32 0.0, %v1259
    %v1261 = vpop.f32.mrf.mxu0
    %v1262 = vpop.f32.mrf.mxu0
    %v1263 = vadd.f32 0.0, %v1262
    %v1264 = vpop.f32.mrf.mxu0
    %1265 = vmatprep.mubr.bf16.mxu0 %v929
    %1266 = vmatmul.mubr.bf16.gmra.mxu0 %v928
    %v1267 = vpop.f32.mrf.mxu0
    %v1268 = vadd.f32 0.0, %v1267
    %v1269 = vpop.f32.mrf.mxu0
    %v1270 = vpop.f32.mrf.mxu0
    %v1271 = vadd.f32 0.0, %v1270
    %v1272 = vpop.f32.mrf.mxu0
    %1273 = vmatprep.mubr.bf16.mxu0 %v932
    %1274 = vmatmul.mubr.bf16.gmra.mxu0 %v931
    %v1275 = vpop.f32.mrf.mxu0
    %v1276 = vadd.f32 0.0, %v1275
    %v1277 = vpop.f32.mrf.mxu0
    %v1278 = vpop.f32.mrf.mxu0
    %v1279 = vadd.f32 0.0, %v1278
    %v1280 = vpop.f32.mrf.mxu0
    %1281 = vmatprep.mubr.bf16.mxu0 %v935
    %1282 = vmatmul.mubr.bf16.gmra.mxu0 %v934
    %v1283 = vpop.f32.mrf.mxu0
    %v1284 = vadd.f32 0.0, %v1283
    %v1285 = vpop.f32.mrf.mxu0
    %v1286 = vpop.f32.mrf.mxu0
    %v1287 = vadd.f32 0.0, %v1286
    %v1288 = vpop.f32.mrf.mxu0
    %1289 = vdwg.mxu0
    %1290 = vmatprep.subr.bf16.mxu0 0
    %1291 = vmatpush1.bf16.msra.mxu0 %v1104
    %1292 = vmatprep.subr.bf16.mxu0 0
    %1293 = vmatpush1.bf16.msra.mxu0 %v1103
    %1294 = vmatprep.subr.bf16.mxu0 0
    %1295 = vmatpush1.bf16.msra.mxu0 %v1102
    %1296 = vmatprep.subr.bf16.mxu0 0
    %1297 = vmatpush1.bf16.msra.mxu0 %v1101
    %1298 = vmatprep.subr.bf16.mxu0 0
    %1299 = vmatpush1.bf16.msra.mxu0 %v1100
    %1300 = vmatprep.subr.bf16.mxu0 0
    %1301 = vmatpush1.bf16.msra.mxu0 %v1099
    %1302 = vmatprep.subr.bf16.mxu0 0
    %1303 = vmatpush1.bf16.msra.mxu0 %v1098
    %1304 = vmatprep.subr.bf16.mxu0 0
    %1305 = vmatpush1.bf16.msra.mxu0 %v1097
    %1306 = vmatprep.subr.bf16.mxu0 0
    %1307 = vmatpush2.bf16.msra.mxu0 0
    %1308 = vmatprep.subr.bf16.mxu0 0
    %1309 = vmatpush2.bf16.msra.mxu0 0
    %1310 = vmatprep.subr.bf16.mxu0 0
    %1311 = vmatpush2.bf16.msra.mxu0 0
    %1312 = vmatprep.subr.bf16.mxu0 0
    %1313 = vmatpush2.bf16.msra.mxu0 0
    %1314 = vmatprep.subr.bf16.mxu0 0
    %1315 = vmatpush2.bf16.msra.mxu0 0
    %1316 = vmatprep.subr.bf16.mxu0 0
    %1317 = vmatpush2.bf16.msra.mxu0 0
    %1318 = vmatprep.subr.bf16.mxu0 0
    %1319 = vmatpush2.bf16.msra.mxu0 0
    %1320 = vmatprep.subr.bf16.mxu0 0
    %1321 = vmatpush2.bf16.msra.mxu0 0
    %1322 = vmatprep.mubr.bf16.mxu0 0
    %1323 = vmatmul.mubr.bf16.gmra.mxu0 %v891
    %v1324 = vpop.f32.mrf.mxu0
    %v1325 = vadd.f32 %v1164, %v1324
    %v1326 = vpop.f32.mrf.mxu0
    %v1327 = vpop.f32.mrf.mxu0
    %v1328 = vadd.f32 %v1167, %v1327
    %v1329 = vpop.f32.mrf.mxu0
    %1330 = vmatprep.mubr.bf16.mxu0 0
    %1331 = vmatmul.mubr.bf16.gmra.mxu0 %v894
    %v1332 = vpop.f32.mrf.mxu0
    %v1333 = vadd.f32 %v1172, %v1332
    %v1334 = vpop.f32.mrf.mxu0
    %v1335 = vpop.f32.mrf.mxu0
    %v1336 = vadd.f32 %v1175, %v1335
    %v1337 = vpop.f32.mrf.mxu0
    %1338 = vmatprep.mubr.bf16.mxu0 0
    %1339 = vmatmul.mubr.bf16.gmra.mxu0 %v897
    %v1340 = vpop.f32.mrf.mxu0
    %v1341 = vadd.f32 %v1180, %v1340
    %v1342 = vpop.f32.mrf.mxu0
    %v1343 = vpop.f32.mrf.mxu0
    %v1344 = vadd.f32 %v1183, %v1343
    %v1345 = vpop.f32.mrf.mxu0
    %1346 = vmatprep.mubr.bf16.mxu0 0
    %1347 = vmatmul.mubr.bf16.gmra.mxu0 %v900
    %v1348 = vpop.f32.mrf.mxu0
    %v1349 = vadd.f32 %v1188, %v1348
    %v1350 = vpop.f32.mrf.mxu0
    %v1351 = vpop.f32.mrf.mxu0
    %v1352 = vadd.f32 %v1191, %v1351
    %v1353 = vpop.f32.mrf.mxu0
    %1354 = vmatprep.mubr.bf16.mxu0 0
    %1355 = vmatmul.mubr.bf16.gmra.mxu0 %v903
    %v1356 = vpop.f32.mrf.mxu0
    %v1357 = vadd.f32 %v1196, %v1356
    %v1358 = vpop.f32.mrf.mxu0
    %v1359 = vpop.f32.mrf.mxu0
    %v1360 = vadd.f32 %v1199, %v1359
    %v1361 = vpop.f32.mrf.mxu0
    %1362 = vmatprep.mubr.bf16.mxu0 0
    %1363 = vmatmul.mubr.bf16.gmra.mxu0 %v906
    %v1364 = vpop.f32.mrf.mxu0
    %v1365 = vadd.f32 %v1204, %v1364
    %v1366 = vpop.f32.mrf.mxu0
    %v1367 = vpop.f32.mrf.mxu0
    %v1368 = vadd.f32 %v1207, %v1367
    %v1369 = vpop.f32.mrf.mxu0
    %1370 = vmatprep.mubr.bf16.mxu0 0
    %1371 = vmatmul.mubr.bf16.gmra.mxu0 %v909
    %v1372 = vpop.f32.mrf.mxu0
    %v1373 = vadd.f32 %v1212, %v1372
    %v1374 = vpop.f32.mrf.mxu0
    %v1375 = vpop.f32.mrf.mxu0
    %v1376 = vadd.f32 %v1215, %v1375
    %v1377 = vpop.f32.mrf.mxu0
    %1378 = vmatprep.mubr.bf16.mxu0 0
    %1379 = vmatmul.mubr.bf16.gmra.mxu0 %v912
    %v1380 = vpop.f32.mrf.mxu0
    %v1381 = vadd.f32 %v1220, %v1380
    %v1382 = vpop.f32.mrf.mxu0
    %v1383 = vpop.f32.mrf.mxu0
    %v1384 = vadd.f32 %v1223, %v1383
    %v1385 = vpop.f32.mrf.mxu0
    %1386 = vmatprep.mubr.bf16.mxu0 0
    %1387 = vmatmul.mubr.bf16.gmra.mxu0 %v915
    %v1388 = vpop.f32.mrf.mxu0
    %v1389 = vadd.f32 %v1228, %v1388
    %v1390 = vpop.f32.mrf.mxu0
    %v1391 = vpop.f32.mrf.mxu0
    %v1392 = vadd.f32 %v1231, %v1391
    %v1393 = vpop.f32.mrf.mxu0
    %1394 = vmatprep.mubr.bf16.mxu0 0
    %1395 = vmatmul.mubr.bf16.gmra.mxu0 %v918
    %v1396 = vpop.f32.mrf.mxu0
    %v1397 = vadd.f32 %v1236, %v1396
    %v1398 = vpop.f32.mrf.mxu0
    %v1399 = vpop.f32.mrf.mxu0
    %v1400 = vadd.f32 %v1239, %v1399
    %v1401 = vpop.f32.mrf.mxu0
    %1402 = vmatprep.mubr.bf16.mxu0 0
    %1403 = vmatmul.mubr.bf16.gmra.mxu0 %v921
    %v1404 = vpop.f32.mrf.mxu0
    %v1405 = vadd.f32 %v1244, %v1404
    %v1406 = vpop.f32.mrf.mxu0
    %v1407 = vpop.f32.mrf.mxu0
    %v1408 = vadd.f32 %v1247, %v1407
    %v1409 = vpop.f32.mrf.mxu0
    %1410 = vmatprep.mubr.bf16.mxu0 0
    %1411 = vmatmul.mubr.bf16.gmra.mxu0 %v924
    %v1412 = vpop.f32.mrf.mxu0
    %v1413 = vadd.f32 %v1252, %v1412
    %v1414 = vpop.f32.mrf.mxu0
    %v1415 = vpop.f32.mrf.mxu0
    %v1416 = vadd.f32 %v1255, %v1415
    %v1417 = vpop.f32.mrf.mxu0
    %1418 = vmatprep.mubr.bf16.mxu0 0
    %1419 = vmatmul.mubr.bf16.gmra.mxu0 %v927
    %v1420 = vpop.f32.mrf.mxu0
    %v1421 = vadd.f32 %v1260, %v1420
    %v1422 = vpop.f32.mrf.mxu0
    %v1423 = vpop.f32.mrf.mxu0
    %v1424 = vadd.f32 %v1263, %v1423
    %v1425 = vpop.f32.mrf.mxu0
    %1426 = vmatprep.mubr.bf16.mxu0 0
    %1427 = vmatmul.mubr.bf16.gmra.mxu0 %v930
    %v1428 = vpop.f32.mrf.mxu0
    %v1429 = vadd.f32 %v1268, %v1428
    %v1430 = vpop.f32.mrf.mxu0
    %v1431 = vpop.f32.mrf.mxu0
    %v1432 = vadd.f32 %v1271, %v1431
    %v1433 = vpop.f32.mrf.mxu0
    %1434 = vmatprep.mubr.bf16.mxu0 0
    %1435 = vmatmul.mubr.bf16.gmra.mxu0 %v933
    %v1436 = vpop.f32.mrf.mxu0
    %v1437 = vadd.f32 %v1276, %v1436
    %v1438 = vpop.f32.mrf.mxu0
    %v1439 = vpop.f32.mrf.mxu0
    %v1440 = vadd.f32 %v1279, %v1439
    %v1441 = vpop.f32.mrf.mxu0
    %1442 = vmatprep.mubr.bf16.mxu0 0
    %1443 = vmatmul.mubr.bf16.gmra.mxu0 %v936
    %v1444 = vpop.f32.mrf.mxu0
    %v1445 = vadd.f32 %v1284, %v1444
    %v1446 = vpop.f32.mrf.mxu0
    %v1447 = vpop.f32.mrf.mxu0
    %v1448 = vadd.f32 %v1287, %v1447
    %v1449 = vpop.f32.mrf.mxu0
    %1450 = vdwg.mxu0
    %1482 = vrot.lane.b32.xlu0 0.0, 32
    %v1483 = vpop.permute.xlu0 %1482
    %1484 = vrot.lane.b32.xlu0 %v1325, 32
    %v1485 = vpop.permute.xlu0 %1484
    %1486 = vrot.lane.b32.xlu0 %v1328, 32
    %v1487 = vpop.permute.xlu0 %1486
    %1488 = vrot.lane.b32.xlu0 %v1333, 32
    %v1489 = vpop.permute.xlu0 %1488
    %1490 = vrot.lane.b32.xlu0 %v1336, 32
    %v1491 = vpop.permute.xlu0 %1490
    %1492 = vrot.lane.b32.xlu0 %v1341, 32
    %v1493 = vpop.permute.xlu0 %1492
    %1494 = vrot.lane.b32.xlu0 %v1344, 32
    %v1495 = vpop.permute.xlu0 %1494
    %1496 = vrot.lane.b32.xlu0 %v1349, 32
    %v1497 = vpop.permute.xlu0 %1496
    %1498 = vrot.lane.b32.xlu0 %v1352, 32
    %v1499 = vpop.permute.xlu0 %1498
    %1500 = vrot.lane.b32.xlu0 %v1357, 32
    %v1501 = vpop.permute.xlu0 %1500
    %1502 = vrot.lane.b32.xlu0 %v1360, 32
    %v1503 = vpop.permute.xlu0 %1502
    %1504 = vrot.lane.b32.xlu0 %v1365, 32
    %v1505 = vpop.permute.xlu0 %1504
    %1506 = vrot.lane.b32.xlu0 %v1368, 32
    %v1507 = vpop.permute.xlu0 %1506
    %1508 = vrot.lane.b32.xlu0 %v1373, 32
    %v1509 = vpop.permute.xlu0 %1508
    %1510 = vrot.lane.b32.xlu0 %v1376, 32
    %v1511 = vpop.permute.xlu0 %1510
    %1512 = vrot.lane.b32.xlu0 %v1381, 32
    %v1513 = vpop.permute.xlu0 %1512
    %1514 = vrot.lane.b32.xlu0 %v1384, 32
    %v1515 = vpop.permute.xlu0 %1514
    %1516 = vrot.lane.b32.xlu0 %v1389, 32
    %v1517 = vpop.permute.xlu0 %1516
    %1518 = vrot.lane.b32.xlu0 %v1392, 32
    %v1519 = vpop.permute.xlu0 %1518
    %1520 = vrot.lane.b32.xlu0 %v1397, 32
    %v1521 = vpop.permute.xlu0 %1520
    %1522 = vrot.lane.b32.xlu0 %v1400, 32
    %v1523 = vpop.permute.xlu0 %1522
    %1524 = vrot.lane.b32.xlu0 %v1405, 32
    %v1525 = vpop.permute.xlu0 %1524
    %1526 = vrot.lane.b32.xlu0 %v1408, 32
    %v1527 = vpop.permute.xlu0 %1526
    %1528 = vrot.lane.b32.xlu0 %v1413, 32
    %v1529 = vpop.permute.xlu0 %1528
    %1530 = vrot.lane.b32.xlu0 %v1416, 32
    %v1531 = vpop.permute.xlu0 %1530
    %1532 = vrot.lane.b32.xlu0 %v1421, 32
    %v1533 = vpop.permute.xlu0 %1532
    %1534 = vrot.lane.b32.xlu0 %v1424, 32
    %v1535 = vpop.permute.xlu0 %1534
    %1536 = vrot.lane.b32.xlu0 %v1429, 32
    %v1537 = vpop.permute.xlu0 %1536
    %1538 = vrot.lane.b32.xlu0 %v1432, 32
    %v1539 = vpop.permute.xlu0 %1538
    %1540 = vrot.lane.b32.xlu0 %v1437, 32
    %v1541 = vpop.permute.xlu0 %1540
    %1542 = vrot.lane.b32.xlu0 %v1440, 32
    %v1543 = vpop.permute.xlu0 %1542
    %v1575 = vadd.f32 %v1325, %v1483
    %v1576 = vadd.f32 %v1328, %v1483
    %v1577 = vadd.f32 %v1333, %v1485
    %v1578 = vadd.f32 %v1336, %v1487
    %v1579 = vadd.f32 %v1341, %v1489
    %v1580 = vadd.f32 %v1344, %v1491
    %v1581 = vadd.f32 %v1349, %v1493
    %v1582 = vadd.f32 %v1352, %v1495
    %v1583 = vadd.f32 %v1357, %v1497
    %v1584 = vadd.f32 %v1360, %v1499
    %v1585 = vadd.f32 %v1365, %v1501
    %v1586 = vadd.f32 %v1368, %v1503
    %v1587 = vadd.f32 %v1373, %v1505
    %v1588 = vadd.f32 %v1376, %v1507
    %v1589 = vadd.f32 %v1381, %v1509
    %v1590 = vadd.f32 %v1384, %v1511
    %v1591 = vadd.f32 %v1389, %v1513
    %v1592 = vadd.f32 %v1392, %v1515
    %v1593 = vadd.f32 %v1397, %v1517
    %v1594 = vadd.f32 %v1400, %v1519
    %v1595 = vadd.f32 %v1405, %v1521
    %v1596 = vadd.f32 %v1408, %v1523
    %v1597 = vadd.f32 %v1413, %v1525
    %v1598 = vadd.f32 %v1416, %v1527
    %v1599 = vadd.f32 %v1421, %v1529
    %v1600 = vadd.f32 %v1424, %v1531
    %v1601 = vadd.f32 %v1429, %v1533
    %v1602 = vadd.f32 %v1432, %v1535
    %v1603 = vadd.f32 %v1437, %v1537
    %v1604 = vadd.f32 %v1440, %v1539
    %v1605 = vadd.f32 %v1445, %v1541
    %v1606 = vadd.f32 %v1448, %v1543
    %1609 = vrot.lane.b32.xlu0 %v1333, 96
    %v1610 = vpop.permute.xlu0 %1609
    %1611 = vrot.lane.b32.xlu0 %v1336, 96
    %v1612 = vpop.permute.xlu0 %1611
    %1613 = vrot.lane.b32.xlu0 %v1341, 96
    %v1614 = vpop.permute.xlu0 %1613
    %1615 = vrot.lane.b32.xlu0 %v1344, 96
    %v1616 = vpop.permute.xlu0 %1615
    %1617 = vrot.lane.b32.xlu0 %v1349, 96
    %v1618 = vpop.permute.xlu0 %1617
    %1619 = vrot.lane.b32.xlu0 %v1352, 96
    %v1620 = vpop.permute.xlu0 %1619
    %1621 = vrot.lane.b32.xlu0 %v1357, 96
    %v1622 = vpop.permute.xlu0 %1621
    %1623 = vrot.lane.b32.xlu0 %v1360, 96
    %v1624 = vpop.permute.xlu0 %1623
    %1625 = vrot.lane.b32.xlu0 %v1365, 96
    %v1626 = vpop.permute.xlu0 %1625
    %1627 = vrot.lane.b32.xlu0 %v1368, 96
    %v1628 = vpop.permute.xlu0 %1627
    %1629 = vrot.lane.b32.xlu0 %v1373, 96
    %v1630 = vpop.permute.xlu0 %1629
    %1631 = vrot.lane.b32.xlu0 %v1376, 96
    %v1632 = vpop.permute.xlu0 %1631
    %1633 = vrot.lane.b32.xlu0 %v1381, 96
    %v1634 = vpop.permute.xlu0 %1633
    %1635 = vrot.lane.b32.xlu0 %v1384, 96
    %v1636 = vpop.permute.xlu0 %1635
    %1637 = vrot.lane.b32.xlu0 %v1389, 96
    %v1638 = vpop.permute.xlu0 %1637
    %1639 = vrot.lane.b32.xlu0 %v1392, 96
    %v1640 = vpop.permute.xlu0 %1639
    %1641 = vrot.lane.b32.xlu0 %v1397, 96
    %v1642 = vpop.permute.xlu0 %1641
    %1643 = vrot.lane.b32.xlu0 %v1400, 96
    %v1644 = vpop.permute.xlu0 %1643
    %1645 = vrot.lane.b32.xlu0 %v1405, 96
    %v1646 = vpop.permute.xlu0 %1645
    %1647 = vrot.lane.b32.xlu0 %v1408, 96
    %v1648 = vpop.permute.xlu0 %1647
    %1649 = vrot.lane.b32.xlu0 %v1413, 96
    %v1650 = vpop.permute.xlu0 %1649
    %1651 = vrot.lane.b32.xlu0 %v1416, 96
    %v1652 = vpop.permute.xlu0 %1651
    %1653 = vrot.lane.b32.xlu0 %v1421, 96
    %v1654 = vpop.permute.xlu0 %1653
    %1655 = vrot.lane.b32.xlu0 %v1424, 96
    %v1656 = vpop.permute.xlu0 %1655
    %1657 = vrot.lane.b32.xlu0 %v1429, 96
    %v1658 = vpop.permute.xlu0 %1657
    %1659 = vrot.lane.b32.xlu0 %v1432, 96
    %v1660 = vpop.permute.xlu0 %1659
    %1661 = vrot.lane.b32.xlu0 %v1437, 96
    %v1662 = vpop.permute.xlu0 %1661
    %1663 = vrot.lane.b32.xlu0 %v1440, 96
    %v1664 = vpop.permute.xlu0 %1663
    %1665 = vrot.lane.b32.xlu0 %v1445, 96
    %v1666 = vpop.permute.xlu0 %1665
    %1667 = vrot.lane.b32.xlu0 %v1448, 96
    %v1668 = vpop.permute.xlu0 %1667
    %1669 = vrot.lane.b32.xlu0 0.0, 96
    %v1670 = vpop.permute.xlu0 %1669
    %v1702 = vadd.f32 %v1575, %v1610
    %v1703 = vadd.f32 %v1576, %v1612
    %v1704 = vadd.f32 %v1577, %v1614
    %v1705 = vadd.f32 %v1578, %v1616
    %v1706 = vadd.f32 %v1579, %v1618
    %v1707 = vadd.f32 %v1580, %v1620
    %v1708 = vadd.f32 %v1581, %v1622
    %v1709 = vadd.f32 %v1582, %v1624
    %v1710 = vadd.f32 %v1583, %v1626
    %v1711 = vadd.f32 %v1584, %v1628
    %v1712 = vadd.f32 %v1585, %v1630
    %v1713 = vadd.f32 %v1586, %v1632
    %v1714 = vadd.f32 %v1587, %v1634
    %v1715 = vadd.f32 %v1588, %v1636
    %v1716 = vadd.f32 %v1589, %v1638
    %v1717 = vadd.f32 %v1590, %v1640
    %v1718 = vadd.f32 %v1591, %v1642
    %v1719 = vadd.f32 %v1592, %v1644
    %v1720 = vadd.f32 %v1593, %v1646
    %v1721 = vadd.f32 %v1594, %v1648
    %v1722 = vadd.f32 %v1595, %v1650
    %v1723 = vadd.f32 %v1596, %v1652
    %v1724 = vadd.f32 %v1597, %v1654
    %v1725 = vadd.f32 %v1598, %v1656
    %v1726 = vadd.f32 %v1599, %v1658
    %v1727 = vadd.f32 %v1600, %v1660
    %v1728 = vadd.f32 %v1601, %v1662
    %v1729 = vadd.f32 %v1602, %v1664
    %v1730 = vadd.f32 %v1603, %v1666
    %v1731 = vadd.f32 %v1604, %v1668
    %v1732 = vadd.f32 %v1605, %v1670
    %v1733 = vadd.f32 %v1606, %v1670
    %v1734 = vld [vmem:[%s2] sm:$0x1]
    %v1736 = vlaneseq
    %v1737 = vshrl.u32 %v1736, 7
    %v1738 = vsub.s32 0, %v1737
    %v1739 = vrot.slane %v1734, %v1738
    %1740 = vrot.lane.b32.xlu0 %v1739, 32
    %v1741 = vpop.permute.xlu0 %1740
    %v1743 = vadd.f32 %v1702, %v1741
    %v1744 = vadd.f32 %v1703, %v1741
    %v1745 = vadd.f32 %v1704, %v1741
    %v1746 = vadd.f32 %v1705, %v1741
    %v1747 = vadd.f32 %v1706, %v1741
    %v1748 = vadd.f32 %v1707, %v1741
    %v1749 = vadd.f32 %v1708, %v1741
    %v1750 = vadd.f32 %v1709, %v1741
    %v1751 = vadd.f32 %v1710, %v1741
    %v1752 = vadd.f32 %v1711, %v1741
    %v1753 = vadd.f32 %v1712, %v1741
    %v1754 = vadd.f32 %v1713, %v1741
    %v1755 = vadd.f32 %v1714, %v1741
    %v1756 = vadd.f32 %v1715, %v1741
    %v1757 = vadd.f32 %v1716, %v1741
    %v1758 = vadd.f32 %v1717, %v1741
    %v1759 = vadd.f32 %v1718, %v1741
    %v1760 = vadd.f32 %v1719, %v1741
    %v1761 = vadd.f32 %v1720, %v1741
    %v1762 = vadd.f32 %v1721, %v1741
    %v1763 = vadd.f32 %v1722, %v1741
    %v1764 = vadd.f32 %v1723, %v1741
    %v1765 = vadd.f32 %v1724, %v1741
    %v1766 = vadd.f32 %v1725, %v1741
    %v1767 = vadd.f32 %v1726, %v1741
    %v1768 = vadd.f32 %v1727, %v1741
    %v1769 = vadd.f32 %v1728, %v1741
    %v1770 = vadd.f32 %v1729, %v1741
    %v1771 = vadd.f32 %v1730, %v1741
    %v1772 = vadd.f32 %v1731, %v1741
    %v1773 = vadd.f32 %v1732, %v1741
    %v1774 = vadd.f32 %v1733, %v1741
    %v1775 = vmul.f32 %v1743, 0.2
    %v1776 = vmul.f32 %v1744, 0.2
    %v1777 = vmul.f32 %v1745, 0.2
    %v1778 = vmul.f32 %v1746, 0.2
    %v1779 = vmul.f32 %v1747, 0.2
    %v1780 = vmul.f32 %v1748, 0.2
    %v1781 = vmul.f32 %v1749, 0.2
    %v1782 = vmul.f32 %v1750, 0.2
    %v1783 = vmul.f32 %v1751, 0.2
    %v1784 = vmul.f32 %v1752, 0.2
    %v1785 = vmul.f32 %v1753, 0.2
    %v1786 = vmul.f32 %v1754, 0.2
    %v1787 = vmul.f32 %v1755, 0.2
    %v1788 = vmul.f32 %v1756, 0.2
    %v1789 = vmul.f32 %v1757, 0.2
    %v1790 = vmul.f32 %v1758, 0.2
    %v1791 = vmul.f32 %v1759, 0.2
    %v1792 = vmul.f32 %v1760, 0.2
    %v1793 = vmul.f32 %v1761, 0.2
    %v1794 = vmul.f32 %v1762, 0.2
    %v1795 = vmul.f32 %v1763, 0.2
    %v1796 = vmul.f32 %v1764, 0.2
    %v1797 = vmul.f32 %v1765, 0.2
    %v1798 = vmul.f32 %v1766, 0.2
    %v1799 = vmul.f32 %v1767, 0.2
    %v1800 = vmul.f32 %v1768, 0.2
    %v1801 = vmul.f32 %v1769, 0.2
    %v1802 = vmul.f32 %v1770, 0.2
    %v1803 = vmul.f32 %v1771, 0.2
    %v1804 = vmul.f32 %v1772, 0.2
    %v1805 = vmul.f32 %v1773, 0.2
    %v1806 = vmul.f32 %v1774, 0.2
    %v1807 = vmax.f32 %v1743, %v1775
    %v1808 = vmax.f32 %v1744, %v1776
    %v1809 = vmax.f32 %v1745, %v1777
    %v1810 = vmax.f32 %v1746, %v1778
    %v1811 = vmax.f32 %v1747, %v1779
    %v1812 = vmax.f32 %v1748, %v1780
    %v1813 = vmax.f32 %v1749, %v1781
    %v1814 = vmax.f32 %v1750, %v1782
    %v1815 = vmax.f32 %v1751, %v1783
    %v1816 = vmax.f32 %v1752, %v1784
    %v1817 = vmax.f32 %v1753, %v1785
    %v1818 = vmax.f32 %v1754, %v1786
    %v1819 = vmax.f32 %v1755, %v1787
    %v1820 = vmax.f32 %v1756, %v1788
    %v1821 = vmax.f32 %v1757, %v1789
    %v1822 = vmax.f32 %v1758, %v1790
    %v1823 = vmax.f32 %v1759, %v1791
    %v1824 = vmax.f32 %v1760, %v1792
    %v1825 = vmax.f32 %v1761, %v1793
    %v1826 = vmax.f32 %v1762, %v1794
    %v1827 = vmax.f32 %v1763, %v1795
    %v1828 = vmax.f32 %v1764, %v1796
    %v1829 = vmax.f32 %v1765, %v1797
    %v1830 = vmax.f32 %v1766, %v1798
    %v1831 = vmax.f32 %v1767, %v1799
    %v1832 = vmax.f32 %v1768, %v1800
    %v1833 = vmax.f32 %v1769, %v1801
    %v1834 = vmax.f32 %v1770, %v1802
    %v1835 = vmax.f32 %v1771, %v1803
    %v1836 = vmax.f32 %v1772, %v1804
    %v1837 = vmax.f32 %v1773, %v1805
    %v1838 = vmax.f32 %v1774, %v1806
    %1871 = vrot.lane.b32.xlu0 %v1807, 96
    %v1872 = vpop.permute.xlu0 %1871
    %1873 = vrot.lane.b32.xlu0 %v1808, 96
    %v1874 = vpop.permute.xlu0 %1873
    %1875 = vrot.lane.b32.xlu0 %v1809, 96
    %v1876 = vpop.permute.xlu0 %1875
    %1877 = vrot.lane.b32.xlu0 %v1810, 96
    %v1878 = vpop.permute.xlu0 %1877
    %1879 = vrot.lane.b32.xlu0 %v1811, 96
    %v1880 = vpop.permute.xlu0 %1879
    %1881 = vrot.lane.b32.xlu0 %v1812, 96
    %v1882 = vpop.permute.xlu0 %1881
    %1883 = vrot.lane.b32.xlu0 %v1813, 96
    %v1884 = vpop.permute.xlu0 %1883
    %1885 = vrot.lane.b32.xlu0 %v1814, 96
    %v1886 = vpop.permute.xlu0 %1885
    %1887 = vrot.lane.b32.xlu0 %v1815, 96
    %v1888 = vpop.permute.xlu0 %1887
    %1889 = vrot.lane.b32.xlu0 %v1816, 96
    %v1890 = vpop.permute.xlu0 %1889
    %1891 = vrot.lane.b32.xlu0 %v1817, 96
    %v1892 = vpop.permute.xlu0 %1891
    %1893 = vrot.lane.b32.xlu0 %v1818, 96
    %v1894 = vpop.permute.xlu0 %1893
    %1895 = vrot.lane.b32.xlu0 %v1819, 96
    %v1896 = vpop.permute.xlu0 %1895
    %1897 = vrot.lane.b32.xlu0 %v1820, 96
    %v1898 = vpop.permute.xlu0 %1897
    %1899 = vrot.lane.b32.xlu0 %v1821, 96
    %v1900 = vpop.permute.xlu0 %1899
    %1901 = vrot.lane.b32.xlu0 %v1822, 96
    %v1902 = vpop.permute.xlu0 %1901
    %1903 = vrot.lane.b32.xlu0 %v1823, 96
    %v1904 = vpop.permute.xlu0 %1903
    %1905 = vrot.lane.b32.xlu0 %v1824, 96
    %v1906 = vpop.permute.xlu0 %1905
    %1907 = vrot.lane.b32.xlu0 %v1825, 96
    %v1908 = vpop.permute.xlu0 %1907
    %1909 = vrot.lane.b32.xlu0 %v1826, 96
    %v1910 = vpop.permute.xlu0 %1909
    %1911 = vrot.lane.b32.xlu0 %v1827, 96
    %v1912 = vpop.permute.xlu0 %1911
    %1913 = vrot.lane.b32.xlu0 %v1828, 96
    %v1914 = vpop.permute.xlu0 %1913
    %1915 = vrot.lane.b32.xlu0 %v1829, 96
    %v1916 = vpop.permute.xlu0 %1915
    %1917 = vrot.lane.b32.xlu0 %v1830, 96
    %v1918 = vpop.permute.xlu0 %1917
    %1919 = vrot.lane.b32.xlu0 %v1831, 96
    %v1920 = vpop.permute.xlu0 %1919
    %1921 = vrot.lane.b32.xlu0 %v1832, 96
    %v1922 = vpop.permute.xlu0 %1921
    %1923 = vrot.lane.b32.xlu0 %v1833, 96
    %v1924 = vpop.permute.xlu0 %1923
    %1925 = vrot.lane.b32.xlu0 %v1834, 96
    %v1926 = vpop.permute.xlu0 %1925
    %1927 = vrot.lane.b32.xlu0 %v1835, 96
    %v1928 = vpop.permute.xlu0 %1927
    %1929 = vrot.lane.b32.xlu0 %v1836, 96
    %v1930 = vpop.permute.xlu0 %1929
    %1931 = vrot.lane.b32.xlu0 %v1837, 96
    %v1932 = vpop.permute.xlu0 %1931
    %1933 = vrot.lane.b32.xlu0 %v1838, 96
    %v1934 = vpop.permute.xlu0 %1933
    %v1967 = vrot.slane %v1872, 7
    %v1968 = vrot.slane %v1874, 7
    %v1969 = vrot.slane %v1876, 7
    %v1970 = vrot.slane %v1878, 7
    %v1971 = vrot.slane %v1880, 7
    %v1972 = vrot.slane %v1882, 7
    %v1973 = vrot.slane %v1884, 7
    %v1974 = vrot.slane %v1886, 7
    %v1975 = vrot.slane %v1888, 7
    %v1976 = vrot.slane %v1890, 7
    %v1977 = vrot.slane %v1892, 7
    %v1978 = vrot.slane %v1894, 7
    %v1979 = vrot.slane %v1896, 7
    %v1980 = vrot.slane %v1898, 7
    %v1981 = vrot.slane %v1900, 7
    %v1982 = vrot.slane %v1902, 7
    %v1983 = vrot.slane %v1904, 7
    %v1984 = vrot.slane %v1906, 7
    %v1985 = vrot.slane %v1908, 7
    %v1986 = vrot.slane %v1910, 7
    %v1987 = vrot.slane %v1912, 7
    %v1988 = vrot.slane %v1914, 7
    %v1989 = vrot.slane %v1916, 7
    %v1990 = vrot.slane %v1918, 7
    %v1991 = vrot.slane %v1920, 7
    %v1992 = vrot.slane %v1922, 7
    %v1993 = vrot.slane %v1924, 7
    %v1994 = vrot.slane %v1926, 7
    %v1995 = vrot.slane %v1928, 7
    %v1996 = vrot.slane %v1930, 7
    %v1997 = vrot.slane %v1932, 7
    %v1998 = vrot.slane %v1934, 7
    %v1999 = vsel %vm599, %v1997, %v1998
    %v2000 = vsel %vm599, %v1996, %v1997
    %v2001 = vsel %vm599, %v1995, %v1996
    %v2002 = vsel %vm599, %v1994, %v1995
    %v2003 = vsel %vm599, %v1993, %v1994
    %v2004 = vsel %vm599, %v1992, %v1993
    %v2005 = vsel %vm599, %v1991, %v1992
    %v2006 = vsel %vm599, %v1990, %v1991
    %v2007 = vsel %vm599, %v1989, %v1990
    %v2008 = vsel %vm599, %v1988, %v1989
    %v2009 = vsel %vm599, %v1987, %v1988
    %v2010 = vsel %vm599, %v1986, %v1987
    %v2011 = vsel %vm599, %v1985, %v1986
    %v2012 = vsel %vm599, %v1984, %v1985
    %v2013 = vsel %vm599, %v1983, %v1984
    %v2014 = vsel %vm599, %v1982, %v1983
    %v2015 = vsel %vm599, %v1981, %v1982
    %v2016 = vsel %vm599, %v1980, %v1981
    %v2017 = vsel %vm599, %v1979, %v1980
    %v2018 = vsel %vm599, %v1978, %v1979
    %v2019 = vsel %vm599, %v1977, %v1978
    %v2020 = vsel %vm599, %v1976, %v1977
    %v2021 = vsel %vm599, %v1975, %v1976
    %v2022 = vsel %vm599, %v1974, %v1975
    %v2023 = vsel %vm599, %v1973, %v1974
    %v2024 = vsel %vm599, %v1972, %v1973
    %v2025 = vsel %vm599, %v1971, %v1972
    %v2026 = vsel %vm599, %v1970, %v1971
    %v2027 = vsel %vm599, %v1969, %v1970
    %v2028 = vsel %vm599, %v1968, %v1969
    %v2029 = vsel %vm599, %v1967, %v1968
    %v2030 = vsel %vm599, %v1998, %v1967
    %v2031 = vsel %vm664, %v2030, 0.0
    %v2032 = vsel %vm665, %v2029, 0.0
    %v2033 = vsel %vm666, %v2028, 0.0
    %v2034 = vsel %vm667, %v2027, 0.0
    %v2035 = vsel %vm668, %v2026, 0.0
    %v2036 = vsel %vm669, %v2025, 0.0
    %v2037 = vsel %vm670, %v2024, 0.0
    %v2038 = vsel %vm671, %v2023, 0.0
    %v2039 = vsel %vm672, %v2022, 0.0
    %v2040 = vsel %vm673, %v2021, 0.0
    %v2041 = vsel %vm674, %v2020, 0.0
    %v2042 = vsel %vm675, %v2019, 0.0
    %v2043 = vsel %vm676, %v2018, 0.0
    %v2044 = vsel %vm677, %v2017, 0.0
    %v2045 = vsel %vm678, %v2016, 0.0
    %v2046 = vsel %vm679, %v2015, 0.0
    %v2047 = vsel %vm680, %v2014, 0.0
    %v2048 = vsel %vm681, %v2013, 0.0
    %v2049 = vsel %vm682, %v2012, 0.0
    %v2050 = vsel %vm683, %v2011, 0.0
    %v2051 = vsel %vm684, %v2010, 0.0
    %v2052 = vsel %vm685, %v2009, 0.0
    %v2053 = vsel %vm686, %v2008, 0.0
    %v2054 = vsel %vm687, %v2007, 0.0
    %v2055 = vsel %vm688, %v2006, 0.0
    %v2056 = vsel %vm689, %v2005, 0.0
    %v2057 = vsel %vm690, %v2004, 0.0
    %v2058 = vsel %vm691, %v2003, 0.0
    %v2059 = vsel %vm692, %v2002, 0.0
    %v2060 = vsel %vm693, %v2001, 0.0
    %v2061 = vsel %vm694, %v2000, 0.0
    %v2062 = vsel %vm695, %v1999, 0.0
    %v2063 = vrot.slane %v1872, 1
    %v2064 = vrot.slane %v1874, 1
    %v2065 = vrot.slane %v1876, 1
    %v2066 = vrot.slane %v1878, 1
    %v2067 = vrot.slane %v1880, 1
    %v2068 = vrot.slane %v1882, 1
    %v2069 = vrot.slane %v1884, 1
    %v2070 = vrot.slane %v1886, 1
    %v2071 = vrot.slane %v1888, 1
    %v2072 = vrot.slane %v1890, 1
    %v2073 = vrot.slane %v1892, 1
    %v2074 = vrot.slane %v1894, 1
    %v2075 = vrot.slane %v1896, 1
    %v2076 = vrot.slane %v1898, 1
    %v2077 = vrot.slane %v1900, 1
    %v2078 = vrot.slane %v1902, 1
    %v2079 = vrot.slane %v1904, 1
    %v2080 = vrot.slane %v1906, 1
    %v2081 = vrot.slane %v1908, 1
    %v2082 = vrot.slane %v1910, 1
    %v2083 = vrot.slane %v1912, 1
    %v2084 = vrot.slane %v1914, 1
    %v2085 = vrot.slane %v1916, 1
    %v2086 = vrot.slane %v1918, 1
    %v2087 = vrot.slane %v1920, 1
    %v2088 = vrot.slane %v1922, 1
    %v2089 = vrot.slane %v1924, 1
    %v2090 = vrot.slane %v1926, 1
    %v2091 = vrot.slane %v1928, 1
    %v2092 = vrot.slane %v1930, 1
    %v2093 = vrot.slane %v1932, 1
    %v2094 = vrot.slane %v1934, 1
    %v2095 = vsel %vm760, %v2093, %v2094
    %v2096 = vsel %vm760, %v2092, %v2093
    %v2097 = vsel %vm760, %v2091, %v2092
    %v2098 = vsel %vm760, %v2090, %v2091
    %v2099 = vsel %vm760, %v2089, %v2090
    %v2100 = vsel %vm760, %v2088, %v2089
    %v2101 = vsel %vm760, %v2087, %v2088
    %v2102 = vsel %vm760, %v2086, %v2087
    %v2103 = vsel %vm760, %v2085, %v2086
    %v2104 = vsel %vm760, %v2084, %v2085
    %v2105 = vsel %vm760, %v2083, %v2084
    %v2106 = vsel %vm760, %v2082, %v2083
    %v2107 = vsel %vm760, %v2081, %v2082
    %v2108 = vsel %vm760, %v2080, %v2081
    %v2109 = vsel %vm760, %v2079, %v2080
    %v2110 = vsel %vm760, %v2078, %v2079
    %v2111 = vsel %vm760, %v2077, %v2078
    %v2112 = vsel %vm760, %v2076, %v2077
    %v2113 = vsel %vm760, %v2075, %v2076
    %v2114 = vsel %vm760, %v2074, %v2075
    %v2115 = vsel %vm760, %v2073, %v2074
    %v2116 = vsel %vm760, %v2072, %v2073
    %v2117 = vsel %vm760, %v2071, %v2072
    %v2118 = vsel %vm760, %v2070, %v2071
    %v2119 = vsel %vm760, %v2069, %v2070
    %v2120 = vsel %vm760, %v2068, %v2069
    %v2121 = vsel %vm760, %v2067, %v2068
    %v2122 = vsel %vm760, %v2066, %v2067
    %v2123 = vsel %vm760, %v2065, %v2066
    %v2124 = vsel %vm760, %v2064, %v2065
    %v2125 = vsel %vm760, %v2063, %v2064
    %v2126 = vsel %vm760, %v2094, %v2063
    %v2127 = vsel %vm825, %v2125, 0.0
    %v2128 = vsel %vm826, %v2124, 0.0
    %v2129 = vsel %vm827, %v2123, 0.0
    %v2130 = vsel %vm828, %v2122, 0.0
    %v2131 = vsel %vm829, %v2121, 0.0
    %v2132 = vsel %vm830, %v2120, 0.0
    %v2133 = vsel %vm831, %v2119, 0.0
    %v2134 = vsel %vm832, %v2118, 0.0
    %v2135 = vsel %vm833, %v2117, 0.0
    %v2136 = vsel %vm834, %v2116, 0.0
    %v2137 = vsel %vm835, %v2115, 0.0
    %v2138 = vsel %vm836, %v2114, 0.0
    %v2139 = vsel %vm837, %v2113, 0.0
    %v2140 = vsel %vm838, %v2112, 0.0
    %v2141 = vsel %vm839, %v2111, 0.0
    %v2142 = vsel %vm840, %v2110, 0.0
    %v2143 = vsel %vm841, %v2109, 0.0
    %v2144 = vsel %vm842, %v2108, 0.0
    %v2145 = vsel %vm843, %v2107, 0.0
    %v2146 = vsel %vm844, %v2106, 0.0
    %v2147 = vsel %vm845, %v2105, 0.0
    %v2148 = vsel %vm846, %v2104, 0.0
    %v2149 = vsel %vm847, %v2103, 0.0
    %v2150 = vsel %vm848, %v2102, 0.0
    %v2151 = vsel %vm849, %v2101, 0.0
    %v2152 = vsel %vm850, %v2100, 0.0
    %v2153 = vsel %vm851, %v2099, 0.0
    %v2154 = vsel %vm852, %v2098, 0.0
    %v2155 = vsel %vm853, %v2097, 0.0
    %v2156 = vsel %vm854, %v2096, 0.0
    %v2157 = vsel %vm855, %v2095, 0.0
    %v2158 = vsel %vm856, %v2126, 0.0
    %2191 = vrot.lane.b32.xlu0 %v2127, 64
    %v2192 = vpop.permute.xlu0 %2191
    %2193 = vrot.lane.b32.xlu0 %v2128, 64
    %v2194 = vpop.permute.xlu0 %2193
    %2195 = vrot.lane.b32.xlu0 %v2129, 64
    %v2196 = vpop.permute.xlu0 %2195
    %2197 = vrot.lane.b32.xlu0 %v2130, 64
    %v2198 = vpop.permute.xlu0 %2197
    %2199 = vrot.lane.b32.xlu0 %v2131, 64
    %v2200 = vpop.permute.xlu0 %2199
    %2201 = vrot.lane.b32.xlu0 %v2132, 64
    %v2202 = vpop.permute.xlu0 %2201
    %2203 = vrot.lane.b32.xlu0 %v2133, 64
    %v2204 = vpop.permute.xlu0 %2203
    %2205 = vrot.lane.b32.xlu0 %v2134, 64
    %v2206 = vpop.permute.xlu0 %2205
    %2207 = vrot.lane.b32.xlu0 %v2135, 64
    %v2208 = vpop.permute.xlu0 %2207
    %2209 = vrot.lane.b32.xlu0 %v2136, 64
    %v2210 = vpop.permute.xlu0 %2209
    %2211 = vrot.lane.b32.xlu0 %v2137, 64
    %v2212 = vpop.permute.xlu0 %2211
    %2213 = vrot.lane.b32.xlu0 %v2138, 64
    %v2214 = vpop.permute.xlu0 %2213
    %2215 = vrot.lane.b32.xlu0 %v2139, 64
    %v2216 = vpop.permute.xlu0 %2215
    %2217 = vrot.lane.b32.xlu0 %v2140, 64
    %v2218 = vpop.permute.xlu0 %2217
    %2219 = vrot.lane.b32.xlu0 %v2141, 64
    %v2220 = vpop.permute.xlu0 %2219
    %2221 = vrot.lane.b32.xlu0 %v2142, 64
    %v2222 = vpop.permute.xlu0 %2221
    %2223 = vrot.lane.b32.xlu0 %v2143, 64
    %v2224 = vpop.permute.xlu0 %2223
    %2225 = vrot.lane.b32.xlu0 %v2144, 64
    %v2226 = vpop.permute.xlu0 %2225
    %2227 = vrot.lane.b32.xlu0 %v2145, 64
    %v2228 = vpop.permute.xlu0 %2227
    %2229 = vrot.lane.b32.xlu0 %v2146, 64
    %v2230 = vpop.permute.xlu0 %2229
    %2231 = vrot.lane.b32.xlu0 %v2147, 64
    %v2232 = vpop.permute.xlu0 %2231
    %2233 = vrot.lane.b32.xlu0 %v2148, 64
    %v2234 = vpop.permute.xlu0 %2233
    %2235 = vrot.lane.b32.xlu0 %v2149, 64
    %v2236 = vpop.permute.xlu0 %2235
    %2237 = vrot.lane.b32.xlu0 %v2150, 64
    %v2238 = vpop.permute.xlu0 %2237
    %2239 = vrot.lane.b32.xlu0 %v2151, 64
    %v2240 = vpop.permute.xlu0 %2239
    %2241 = vrot.lane.b32.xlu0 %v2152, 64
    %v2242 = vpop.permute.xlu0 %2241
    %2243 = vrot.lane.b32.xlu0 %v2153, 64
    %v2244 = vpop.permute.xlu0 %2243
    %2245 = vrot.lane.b32.xlu0 %v2154, 64
    %v2246 = vpop.permute.xlu0 %2245
    %2247 = vrot.lane.b32.xlu0 %v2155, 64
    %v2248 = vpop.permute.xlu0 %2247
    %2249 = vrot.lane.b32.xlu0 %v2156, 64
    %v2250 = vpop.permute.xlu0 %2249
    %2251 = vrot.lane.b32.xlu0 %v2157, 64
    %v2252 = vpop.permute.xlu0 %2251
    %2253 = vrot.lane.b32.xlu0 %v2158, 64
    %v2254 = vpop.permute.xlu0 %2253
    %vm2287 = vcmask 261120
    %v2288 = vsel %vm2287, %v2031, %v1807
    %v2289 = vsel %vm2287, %v2032, %v1808
    %v2290 = vsel %vm2287, %v2033, %v1809
    %v2291 = vsel %vm2287, %v2034, %v1810
    %v2292 = vsel %vm2287, %v2035, %v1811
    %v2293 = vsel %vm2287, %v2036, %v1812
    %v2294 = vsel %vm2287, %v2037, %v1813
    %v2295 = vsel %vm2287, %v2038, %v1814
    %v2296 = vsel %vm2287, %v2039, %v1815
    %v2297 = vsel %vm2287, %v2040, %v1816
    %v2298 = vsel %vm2287, %v2041, %v1817
    %v2299 = vsel %vm2287, %v2042, %v1818
    %v2300 = vsel %vm2287, %v2043, %v1819
    %v2301 = vsel %vm2287, %v2044, %v1820
    %v2302 = vsel %vm2287, %v2045, %v1821
    %v2303 = vsel %vm2287, %v2046, %v1822
    %v2304 = vsel %vm2287, %v2047, %v1823
    %v2305 = vsel %vm2287, %v2048, %v1824
    %v2306 = vsel %vm2287, %v2049, %v1825
    %v2307 = vsel %vm2287, %v2050, %v1826
    %v2308 = vsel %vm2287, %v2051, %v1827
    %v2309 = vsel %vm2287, %v2052, %v1828
    %v2310 = vsel %vm2287, %v2053, %v1829
    %v2311 = vsel %vm2287, %v2054, %v1830
    %v2312 = vsel %vm2287, %v2055, %v1831
    %v2313 = vsel %vm2287, %v2056, %v1832
    %v2314 = vsel %vm2287, %v2057, %v1833
    %v2315 = vsel %vm2287, %v2058, %v1834
    %v2316 = vsel %vm2287, %v2059, %v1835
    %v2317 = vsel %vm2287, %v2060, %v1836
    %v2318 = vsel %vm2287, %v2061, %v1837
    %v2319 = vsel %vm2287, %v2062, %v1838
    %vm2320 = vcmask 523264
    %v2321 = vsel %vm2320, %v2288, %v2192
    %v2322 = vsel %vm2320, %v2289, %v2194
    %v2323 = vsel %vm2320, %v2290, %v2196
    %v2324 = vsel %vm2320, %v2291, %v2198
    %v2325 = vsel %vm2320, %v2292, %v2200
    %v2326 = vsel %vm2320, %v2293, %v2202
    %v2327 = vsel %vm2320, %v2294, %v2204
    %v2328 = vsel %vm2320, %v2295, %v2206
    %v2329 = vsel %vm2320, %v2296, %v2208
    %v2330 = vsel %vm2320, %v2297, %v2210
    %v2331 = vsel %vm2320, %v2298, %v2212
    %v2332 = vsel %vm2320, %v2299, %v2214
    %v2333 = vsel %vm2320, %v2300, %v2216
    %v2334 = vsel %vm2320, %v2301, %v2218
    %v2335 = vsel %vm2320, %v2302, %v2220
    %v2336 = vsel %vm2320, %v2303, %v2222
    %v2337 = vsel %vm2320, %v2304, %v2224
    %v2338 = vsel %vm2320, %v2305, %v2226
    %v2339 = vsel %vm2320, %v2306, %v2228
    %v2340 = vsel %vm2320, %v2307, %v2230
    %v2341 = vsel %vm2320, %v2308, %v2232
    %v2342 = vsel %vm2320, %v2309, %v2234
    %v2343 = vsel %vm2320, %v2310, %v2236
    %v2344 = vsel %vm2320, %v2311, %v2238
    %v2345 = vsel %vm2320, %v2312, %v2240
    %v2346 = vsel %vm2320, %v2313, %v2242
    %v2347 = vsel %vm2320, %v2314, %v2244
    %v2348 = vsel %vm2320, %v2315, %v2246
    %v2349 = vsel %vm2320, %v2316, %v2248
    %v2350 = vsel %vm2320, %v2317, %v2250
    %v2351 = vsel %vm2320, %v2318, %v2252
    %v2352 = vsel %vm2320, %v2319, %v2254
    %v2353 = vpack.c.bf16 %v2322, %v2321
    %v2354 = vpack.c.bf16 %v2324, %v2323
    %v2355 = vpack.c.bf16 %v2326, %v2325
    %v2356 = vpack.c.bf16 %v2328, %v2327
    %v2357 = vpack.c.bf16 %v2330, %v2329
    %v2358 = vpack.c.bf16 %v2332, %v2331
    %v2359 = vpack.c.bf16 %v2334, %v2333
    %v2360 = vpack.c.bf16 %v2336, %v2335
    %v2361 = vpack.c.bf16 %v2338, %v2337
    %v2362 = vpack.c.bf16 %v2340, %v2339
    %v2363 = vpack.c.bf16 %v2342, %v2341
    %v2364 = vpack.c.bf16 %v2344, %v2343
    %v2365 = vpack.c.bf16 %v2346, %v2345
    %v2366 = vpack.c.bf16 %v2348, %v2347
    %v2367 = vpack.c.bf16 %v2350, %v2349
    %v2368 = vpack.c.bf16 %v2352, %v2351
    %2385 = vrot.lane.b32.xlu0 %v2353, 96
    %v2386 = vpop.permute.xlu0 %2385
    %2387 = vrot.lane.b32.xlu0 %v2354, 96
    %v2388 = vpop.permute.xlu0 %2387
    %2389 = vrot.lane.b32.xlu0 %v2355, 96
    %v2390 = vpop.permute.xlu0 %2389
    %2391 = vrot.lane.b32.xlu0 %v2356, 96
    %v2392 = vpop.permute.xlu0 %2391
    %2393 = vrot.lane.b32.xlu0 %v2357, 96
    %v2394 = vpop.permute.xlu0 %2393
    %2395 = vrot.lane.b32.xlu0 %v2358, 96
    %v2396 = vpop.permute.xlu0 %2395
    %2397 = vrot.lane.b32.xlu0 %v2359, 96
    %v2398 = vpop.permute.xlu0 %2397
    %2399 = vrot.lane.b32.xlu0 %v2360, 96
    %v2400 = vpop.permute.xlu0 %2399
    %2401 = vrot.lane.b32.xlu0 %v2361, 96
    %v2402 = vpop.permute.xlu0 %2401
    %2403 = vrot.lane.b32.xlu0 %v2362, 96
    %v2404 = vpop.permute.xlu0 %2403
    %2405 = vrot.lane.b32.xlu0 %v2363, 96
    %v2406 = vpop.permute.xlu0 %2405
    %2407 = vrot.lane.b32.xlu0 %v2364, 96
    %v2408 = vpop.permute.xlu0 %2407
    %2409 = vrot.lane.b32.xlu0 %v2365, 96
    %v2410 = vpop.permute.xlu0 %2409
    %2411 = vrot.lane.b32.xlu0 %v2366, 96
    %v2412 = vpop.permute.xlu0 %2411
    %2413 = vrot.lane.b32.xlu0 %v2367, 96
    %v2414 = vpop.permute.xlu0 %2413
    %2415 = vrot.lane.b32.xlu0 %v2368, 96
    %v2416 = vpop.permute.xlu0 %2415
    %2418 = vrot.lane.b32.xlu0 %v2354, 64
    %v2419 = vpop.permute.xlu0 %2418
    %2420 = vrot.lane.b32.xlu0 %v2355, 64
    %v2421 = vpop.permute.xlu0 %2420
    %2422 = vrot.lane.b32.xlu0 %v2356, 64
    %v2423 = vpop.permute.xlu0 %2422
    %2424 = vrot.lane.b32.xlu0 %v2357, 64
    %v2425 = vpop.permute.xlu0 %2424
    %2426 = vrot.lane.b32.xlu0 %v2358, 64
    %v2427 = vpop.permute.xlu0 %2426
    %2428 = vrot.lane.b32.xlu0 %v2359, 64
    %v2429 = vpop.permute.xlu0 %2428
    %2430 = vrot.lane.b32.xlu0 %v2360, 64
    %v2431 = vpop.permute.xlu0 %2430
    %2432 = vrot.lane.b32.xlu0 %v2361, 64
    %v2433 = vpop.permute.xlu0 %2432
    %2434 = vrot.lane.b32.xlu0 %v2362, 64
    %v2435 = vpop.permute.xlu0 %2434
    %2436 = vrot.lane.b32.xlu0 %v2363, 64
    %v2437 = vpop.permute.xlu0 %2436
    %2438 = vrot.lane.b32.xlu0 %v2364, 64
    %v2439 = vpop.permute.xlu0 %2438
    %2440 = vrot.lane.b32.xlu0 %v2365, 64
    %v2441 = vpop.permute.xlu0 %2440
    %2442 = vrot.lane.b32.xlu0 %v2366, 64
    %v2443 = vpop.permute.xlu0 %2442
    %2444 = vrot.lane.b32.xlu0 %v2367, 64
    %v2445 = vpop.permute.xlu0 %2444
    %2446 = vrot.lane.b32.xlu0 %v2368, 64
    %v2447 = vpop.permute.xlu0 %2446
    %2448 = vrot.lane.b32.xlu0 0, 64
    %v2449 = vpop.permute.xlu0 %2448
    %vm2450 = vcmask 785408
    %v2453 = vsel %vm2450, 0, %v2386
    %v2457 = vsel %vm2450, %v2353, %v2388
    %v2461 = vsel %vm2450, %v2354, %v2390
    %v2465 = vsel %vm2450, %v2355, %v2392
    %v2469 = vsel %vm2450, %v2356, %v2394
    %v2473 = vsel %vm2450, %v2357, %v2396
    %v2477 = vsel %vm2450, %v2358, %v2398
    %v2481 = vsel %vm2450, %v2359, %v2400
    %v2485 = vsel %vm2450, %v2360, %v2402
    %v2489 = vsel %vm2450, %v2361, %v2404
    %v2493 = vsel %vm2450, %v2362, %v2406
    %v2497 = vsel %vm2450, %v2363, %v2408
    %v2501 = vsel %vm2450, %v2364, %v2410
    %v2505 = vsel %vm2450, %v2365, %v2412
    %v2509 = vsel %vm2450, %v2366, %v2414
    %v2513 = vsel %vm2450, %v2367, %v2416
    %v2516 = vsel %vm2320, %v2386, %v2419
    %v2519 = vsel %vm2320, %v2388, %v2421
    %v2522 = vsel %vm2320, %v2390, %v2423
    %v2525 = vsel %vm2320, %v2392, %v2425
    %v2528 = vsel %vm2320, %v2394, %v2427
    %v2531 = vsel %vm2320, %v2396, %v2429
    %v2534 = vsel %vm2320, %v2398, %v2431
    %v2537 = vsel %vm2320, %v2400, %v2433
    %v2540 = vsel %vm2320, %v2402, %v2435
    %v2543 = vsel %vm2320, %v2404, %v2437
    %v2546 = vsel %vm2320, %v2406, %v2439
    %v2549 = vsel %vm2320, %v2408, %v2441
    %v2552 = vsel %vm2320, %v2410, %v2443
    %v2555 = vsel %vm2320, %v2412, %v2445
    %v2558 = vsel %vm2320, %v2414, %v2447
    %v2561 = vsel %vm2320, %v2416, %v2449
    %v2563 = vld [vmem:[%s3] sm:$0xf]
    %v2564 = vld [vmem:[%s3 + $0x4] sm:$0xf]
    %v2565 = vld [vmem:[%s3 + $0x8] sm:$0xf]
    %v2566 = vld [vmem:[%s3 + $0xc] sm:$0xf]
    %v2567 = vld [vmem:[%s3 + $0x10] sm:$0xf]
    %v2568 = vld [vmem:[%s3 + $0x14] sm:$0xf]
    %v2569 = vld [vmem:[%s3 + $0x18] sm:$0xf]
    %v2570 = vld [vmem:[%s3 + $0x1c] sm:$0xf]
    %v2571 = vld [vmem:[%s3 + $0x20] sm:$0xf]
    %v2572 = vld [vmem:[%s3 + $0x24] sm:$0xf]
    %v2573 = vld [vmem:[%s3 + $0x28] sm:$0xf]
    %v2574 = vld [vmem:[%s3 + $0x2c] sm:$0xf]
    %v2575 = vld [vmem:[%s3 + $0x30] sm:$0xf]
    %v2576 = vld [vmem:[%s3 + $0x34] sm:$0xf]
    %v2577 = vld [vmem:[%s3 + $0x38] sm:$0xf]
    %v2578 = vld [vmem:[%s3 + $0x3c] sm:$0xf]
    %v2579 = vld [vmem:[%s3 + $0x40] sm:$0xf]
    %v2580 = vld [vmem:[%s3 + $0x44] sm:$0xf]
    %v2581 = vld [vmem:[%s3 + $0x48] sm:$0xf]
    %v2582 = vld [vmem:[%s3 + $0x4c] sm:$0xf]
    %v2583 = vld [vmem:[%s3 + $0x50] sm:$0xf]
    %v2584 = vld [vmem:[%s3 + $0x54] sm:$0xf]
    %v2585 = vld [vmem:[%s3 + $0x58] sm:$0xf]
    %v2586 = vld [vmem:[%s3 + $0x5c] sm:$0xf]
    %v2587 = vld [vmem:[%s3 + $0x60] sm:$0xf]
    %v2588 = vld [vmem:[%s3 + $0x64] sm:$0xf]
    %v2589 = vld [vmem:[%s3 + $0x68] sm:$0xf]
    %v2590 = vld [vmem:[%s3 + $0x6c] sm:$0xf]
    %v2591 = vld [vmem:[%s3 + $0x70] sm:$0xf]
    %v2592 = vld [vmem:[%s3 + $0x74] sm:$0xf]
    %v2593 = vld [vmem:[%s3 + $0x78] sm:$0xf]
    %v2594 = vld [vmem:[%s3 + $0x7c] sm:$0xf]
    %v2595 = vld [vmem:[%s3 + $0x80] sm:$0xf]
    %v2596 = vld [vmem:[%s3 + $0x84] sm:$0xf]
    %v2597 = vld [vmem:[%s3 + $0x88] sm:$0xf]
    %v2598 = vld [vmem:[%s3 + $0x8c] sm:$0xf]
    %v2599 = vld [vmem:[%s4] sm:$0x1]
    %v2601 = vlaneseq
    %v2602 = vshrl.u32 %v2601, 7
    %v2603 = vsub.s32 0, %v2602
    %v2604 = vrot.slane %v2599, %v2603
    %v2642 = vunpack.c.l.b16 %v2563
    %v2643 = vunpack.c.l.b16 %v2564
    %v2644 = vunpack.c.l.b16 %v2565
    %v2645 = vunpack.c.l.b16 %v2566
    %v2646 = vunpack.c.l.b16 %v2567
    %v2647 = vunpack.c.l.b16 %v2568
    %v2648 = vunpack.c.l.b16 %v2569
    %v2649 = vunpack.c.l.b16 %v2570
    %v2650 = vunpack.c.l.b16 %v2571
    %v2651 = vunpack.c.l.b16 %v2572
    %v2652 = vunpack.c.l.b16 %v2573
    %v2653 = vunpack.c.l.b16 %v2574
    %v2654 = vunpack.c.l.b16 %v2575
    %v2655 = vunpack.c.l.b16 %v2576
    %v2656 = vunpack.c.l.b16 %v2577
    %v2657 = vunpack.c.l.b16 %v2578
    %v2658 = vunpack.c.l.b16 %v2579
    %v2659 = vunpack.c.l.b16 %v2580
    %v2660 = vunpack.c.l.b16 %v2581
    %v2661 = vunpack.c.l.b16 %v2582
    %v2662 = vunpack.c.l.b16 %v2583
    %v2663 = vunpack.c.l.b16 %v2584
    %v2664 = vunpack.c.l.b16 %v2585
    %v2665 = vunpack.c.l.b16 %v2586
    %v2666 = vunpack.c.l.b16 %v2587
    %v2667 = vunpack.c.l.b16 %v2588
    %v2668 = vunpack.c.l.b16 %v2589
    %v2669 = vunpack.c.l.b16 %v2590
    %v2670 = vunpack.c.l.b16 %v2591
    %v2671 = vunpack.c.l.b16 %v2592
    %v2672 = vunpack.c.l.b16 %v2593
    %v2673 = vunpack.c.l.b16 %v2594
    %v2674 = vunpack.c.l.b16 %v2595
    %v2675 = vunpack.c.l.b16 %v2596
    %v2676 = vunpack.c.l.b16 %v2597
    %v2677 = vunpack.c.l.b16 %v2598
    %v2678 = vpack.c.b16 %v2643, %v2642
    %v2679 = vpack.c.b16 %v2645, %v2644
    %v2680 = vpack.c.b16 %v2647, %v2646
    %v2681 = vpack.c.b16 %v2649, %v2648
    %v2682 = vpack.c.b16 %v2651, %v2650
    %v2683 = vpack.c.b16 %v2653, %v2652
    %v2684 = vpack.c.b16 %v2655, %v2654
    %v2685 = vpack.c.b16 %v2657, %v2656
    %v2686 = vpack.c.b16 %v2659, %v2658
    %v2687 = vpack.c.b16 %v2661, %v2660
    %v2688 = vpack.c.b16 %v2663, %v2662
    %v2689 = vpack.c.b16 %v2665, %v2664
    %v2690 = vpack.c.b16 %v2667, %v2666
    %v2691 = vpack.c.b16 %v2669, %v2668
    %v2692 = vpack.c.b16 %v2671, %v2670
    %v2693 = vpack.c.b16 %v2673, %v2672
    %v2694 = vpack.c.b16 %v2675, %v2674
    %v2695 = vpack.c.b16 %v2677, %v2676
    %v2714 = vsel %vm2287, %v2419, 0
    %v2716 = vsel %vm2287, %v2421, 0
    %v2718 = vsel %vm2287, %v2423, 0
    %v2720 = vsel %vm2287, %v2425, 0
    %v2722 = vsel %vm2287, %v2427, 0
    %v2724 = vsel %vm2287, %v2429, 0
    %v2726 = vsel %vm2287, %v2431, 0
    %v2728 = vsel %vm2287, %v2433, 0
    %v2730 = vsel %vm2287, %v2435, 0
    %v2732 = vsel %vm2287, %v2437, 0
    %v2734 = vsel %vm2287, %v2439, 0
    %v2736 = vsel %vm2287, %v2441, 0
    %v2738 = vsel %vm2287, %v2443, 0
    %v2740 = vsel %vm2287, %v2445, 0
    %v2742 = vsel %vm2287, %v2447, 0
    %v2744 = vsel %vm2287, %v2449, 0
    %2746 = vmatprep.subr.bf16.mxu0 0
    %2747 = vmatpush1.bf16.msra.mxu0 %v2685
    %2748 = vmatprep.subr.bf16.mxu0 0
    %2749 = vmatpush1.bf16.msra.mxu0 %v2684
    %2750 = vmatprep.subr.bf16.mxu0 0
    %2751 = vmatpush1.bf16.msra.mxu0 %v2683
    %2752 = vmatprep.subr.bf16.mxu0 0
    %2753 = vmatpush1.bf16.msra.mxu0 %v2682
    %2754 = vmatprep.subr.bf16.mxu0 0
    %2755 = vmatpush1.bf16.msra.mxu0 %v2681
    %2756 = vmatprep.subr.bf16.mxu0 0
    %2757 = vmatpush1.bf16.msra.mxu0 %v2680
    %2758 = vmatprep.subr.bf16.mxu0 0
    %2759 = vmatpush1.bf16.msra.mxu0 %v2679
    %2760 = vmatprep.subr.bf16.mxu0 0
    %2761 = vmatpush1.bf16.msra.mxu0 %v2678
    %2762 = vmatprep.subr.bf16.mxu0 0
    %2763 = vmatpush2.bf16.msra.mxu0 %v2693
    %2764 = vmatprep.subr.bf16.mxu0 0
    %2765 = vmatpush2.bf16.msra.mxu0 %v2692
    %2766 = vmatprep.subr.bf16.mxu0 0
    %2767 = vmatpush2.bf16.msra.mxu0 %v2691
    %2768 = vmatprep.subr.bf16.mxu0 0
    %2769 = vmatpush2.bf16.msra.mxu0 %v2690
    %2770 = vmatprep.subr.bf16.mxu0 0
    %2771 = vmatpush2.bf16.msra.mxu0 %v2689
    %2772 = vmatprep.subr.bf16.mxu0 0
    %2773 = vmatpush2.bf16.msra.mxu0 %v2688
    %2774 = vmatprep.subr.bf16.mxu0 0
    %2775 = vmatpush2.bf16.msra.mxu0 %v2687
    %2776 = vmatprep.subr.bf16.mxu0 0
    %2777 = vmatpush2.bf16.msra.mxu0 %v2686
    %2778 = vmatprep.mubr.bf16.mxu0 %v2516
    %2779 = vmatmul.mubr.bf16.gmra.mxu0 %v2453
    %v2780 = vpop.f32.mrf.mxu0
    %v2781 = vadd.f32 %v2604, %v2780
    %v2782 = vpop.f32.mrf.mxu0
    %v2783 = vpop.f32.mrf.mxu0
    %v2784 = vadd.f32 %v2604, %v2783
    %v2785 = vpop.f32.mrf.mxu0
    %2786 = vmatprep.mubr.bf16.mxu0 %v2519
    %2787 = vmatmul.mubr.bf16.gmra.mxu0 %v2457
    %v2788 = vpop.f32.mrf.mxu0
    %v2789 = vadd.f32 %v2604, %v2788
    %v2790 = vpop.f32.mrf.mxu0
    %v2791 = vpop.f32.mrf.mxu0
    %v2792 = vadd.f32 %v2604, %v2791
    %v2793 = vpop.f32.mrf.mxu0
    %2794 = vmatprep.mubr.bf16.mxu0 %v2522
    %2795 = vmatmul.mubr.bf16.gmra.mxu0 %v2461
    %v2796 = vpop.f32.mrf.mxu0
    %v2797 = vadd.f32 %v2604, %v2796
    %v2798 = vpop.f32.mrf.mxu0
    %v2799 = vpop.f32.mrf.mxu0
    %v2800 = vadd.f32 %v2604, %v2799
    %v2801 = vpop.f32.mrf.mxu0
    %2802 = vmatprep.mubr.bf16.mxu0 %v2525
    %2803 = vmatmul.mubr.bf16.gmra.mxu0 %v2465
    %v2804 = vpop.f32.mrf.mxu0
    %v2805 = vadd.f32 %v2604, %v2804
    %v2806 = vpop.f32.mrf.mxu0
    %v2807 = vpop.f32.mrf.mxu0
    %v2808 = vadd.f32 %v2604, %v2807
    %v2809 = vpop.f32.mrf.mxu0
    %2810 = vmatprep.mubr.bf16.mxu0 %v2528
    %2811 = vmatmul.mubr.bf16.gmra.mxu0 %v2469
    %v2812 = vpop.f32.mrf.mxu0
    %v2813 = vadd.f32 %v2604, %v2812
    %v2814 = vpop.f32.mrf.mxu0
    %v2815 = vpop.f32.mrf.mxu0
    %v2816 = vadd.f32 %v2604, %v2815
    %v2817 = vpop.f32.mrf.mxu0
    %2818 = vmatprep.mubr.bf16.mxu0 %v2531
    %2819 = vmatmul.mubr.bf16.gmra.mxu0 %v2473
    %v2820 = vpop.f32.mrf.mxu0
    %v2821 = vadd.f32 %v2604, %v2820
    %v2822 = vpop.f32.mrf.mxu0
    %v2823 = vpop.f32.mrf.mxu0
    %v2824 = vadd.f32 %v2604, %v2823
    %v2825 = vpop.f32.mrf.mxu0
    %2826 = vmatprep.mubr.bf16.mxu0 %v2534
    %2827 = vmatmul.mubr.bf16.gmra.mxu0 %v2477
    %v2828 = vpop.f32.mrf.mxu0
    %v2829 = vadd.f32 %v2604, %v2828
    %v2830 = vpop.f32.mrf.mxu0
    %v2831 = vpop.f32.mrf.mxu0
    %v2832 = vadd.f32 %v2604, %v2831
    %v2833 = vpop.f32.mrf.mxu0
    %2834 = vmatprep.mubr.bf16.mxu0 %v2537
    %2835 = vmatmul.mubr.bf16.gmra.mxu0 %v2481
    %v2836 = vpop.f32.mrf.mxu0
    %v2837 = vadd.f32 %v2604, %v2836
    %v2838 = vpop.f32.mrf.mxu0
    %v2839 = vpop.f32.mrf.mxu0
    %v2840 = vadd.f32 %v2604, %v2839
    %v2841 = vpop.f32.mrf.mxu0
    %2842 = vmatprep.mubr.bf16.mxu0 %v2540
    %2843 = vmatmul.mubr.bf16.gmra.mxu0 %v2485
    %v2844 = vpop.f32.mrf.mxu0
    %v2845 = vadd.f32 %v2604, %v2844
    %v2846 = vpop.f32.mrf.mxu0
    %v2847 = vpop.f32.mrf.mxu0
    %v2848 = vadd.f32 %v2604, %v2847
    %v2849 = vpop.f32.mrf.mxu0
    %2850 = vmatprep.mubr.bf16.mxu0 %v2543
    %2851 = vmatmul.mubr.bf16.gmra.mxu0 %v2489
    %v2852 = vpop.f32.mrf.mxu0
    %v2853 = vadd.f32 %v2604, %v2852
    %v2854 = vpop.f32.mrf.mxu0
    %v2855 = vpop.f32.mrf.mxu0
    %v2856 = vadd.f32 %v2604, %v2855
    %v2857 = vpop.f32.mrf.mxu0
    %2858 = vmatprep.mubr.bf16.mxu0 %v2546
    %2859 = vmatmul.mubr.bf16.gmra.mxu0 %v2493
    %v2860 = vpop.f32.mrf.mxu0
    %v2861 = vadd.f32 %v2604, %v2860
    %v2862 = vpop.f32.mrf.mxu0
    %v2863 = vpop.f32.mrf.mxu0
    %v2864 = vadd.f32 %v2604, %v2863
    %v2865 = vpop.f32.mrf.mxu0
    %2866 = vmatprep.mubr.bf16.mxu0 %v2549
    %2867 = vmatmul.mubr.bf16.gmra.mxu0 %v2497
    %v2868 = vpop.f32.mrf.mxu0
    %v2869 = vadd.f32 %v2604, %v2868
    %v2870 = vpop.f32.mrf.mxu0
    %v2871 = vpop.f32.mrf.mxu0
    %v2872 = vadd.f32 %v2604, %v2871
    %v2873 = vpop.f32.mrf.mxu0
    %2874 = vmatprep.mubr.bf16.mxu0 %v2552
    %2875 = vmatmul.mubr.bf16.gmra.mxu0 %v2501
    %v2876 = vpop.f32.mrf.mxu0
    %v2877 = vadd.f32 %v2604, %v2876
    %v2878 = vpop.f32.mrf.mxu0
    %v2879 = vpop.f32.mrf.mxu0
    %v2880 = vadd.f32 %v2604, %v2879
    %v2881 = vpop.f32.mrf.mxu0
    %2882 = vmatprep.mubr.bf16.mxu0 %v2555
    %2883 = vmatmul.mubr.bf16.gmra.mxu0 %v2505
    %v2884 = vpop.f32.mrf.mxu0
    %v2885 = vadd.f32 %v2604, %v2884
    %v2886 = vpop.f32.mrf.mxu0
    %v2887 = vpop.f32.mrf.mxu0
    %v2888 = vadd.f32 %v2604, %v2887
    %v2889 = vpop.f32.mrf.mxu0
    %2890 = vmatprep.mubr.bf16.mxu0 %v2558
    %2891 = vmatmul.mubr.bf16.gmra.mxu0 %v2509
    %v2892 = vpop.f32.mrf.mxu0
    %v2893 = vadd.f32 %v2604, %v2892
    %v2894 = vpop.f32.mrf.mxu0
    %v2895 = vpop.f32.mrf.mxu0
    %v2896 = vadd.f32 %v2604, %v2895
    %v2897 = vpop.f32.mrf.mxu0
    %2898 = vmatprep.mubr.bf16.mxu0 %v2561
    %2899 = vmatmul.mubr.bf16.gmra.mxu0 %v2513
    %v2900 = vpop.f32.mrf.mxu0
    %v2901 = vadd.f32 %v2604, %v2900
    %v2902 = vpop.f32.mrf.mxu0
    %v2903 = vpop.f32.mrf.mxu0
    %v2904 = vadd.f32 %v2604, %v2903
    %v2905 = vpop.f32.mrf.mxu0
    %2906 = vdwg.mxu0
    %2907 = vmatprep.subr.bf16.mxu0 0
    %2908 = vmatpush1.bf16.msra.mxu0 0
    %2909 = vmatprep.subr.bf16.mxu0 0
    %2910 = vmatpush1.bf16.msra.mxu0 0
    %2911 = vmatprep.subr.bf16.mxu0 0
    %2912 = vmatpush1.bf16.msra.mxu0 0
    %2913 = vmatprep.subr.bf16.mxu0 0
    %2914 = vmatpush1.bf16.msra.mxu0 0
    %2915 = vmatprep.subr.bf16.mxu0 0
    %2916 = vmatpush1.bf16.msra.mxu0 0
    %2917 = vmatprep.subr.bf16.mxu0 0
    %2918 = vmatpush1.bf16.msra.mxu0 0
    %2919 = vmatprep.subr.bf16.mxu0 0
    %2920 = vmatpush1.bf16.msra.mxu0 %v2695
    %2921 = vmatprep.subr.bf16.mxu0 0
    %2922 = vmatpush1.bf16.msra.mxu0 %v2694
    %2923 = vmatprep.subr.bf16.mxu0 0
    %2924 = vmatpush2.bf16.msra.mxu0 0
    %2925 = vmatprep.subr.bf16.mxu0 0
    %2926 = vmatpush2.bf16.msra.mxu0 0
    %2927 = vmatprep.subr.bf16.mxu0 0
    %2928 = vmatpush2.bf16.msra.mxu0 0
    %2929 = vmatprep.subr.bf16.mxu0 0
    %2930 = vmatpush2.bf16.msra.mxu0 0
    %2931 = vmatprep.subr.bf16.mxu0 0
    %2932 = vmatpush2.bf16.msra.mxu0 0
    %2933 = vmatprep.subr.bf16.mxu0 0
    %2934 = vmatpush2.bf16.msra.mxu0 0
    %2935 = vmatprep.subr.bf16.mxu0 0
    %2936 = vmatpush2.bf16.msra.mxu0 0
    %2937 = vmatprep.subr.bf16.mxu0 0
    %2938 = vmatpush2.bf16.msra.mxu0 0
    %2939 = vmatprep.mubr.bf16.mxu0 0
    %2940 = vmatmul.mubr.bf16.gmra.mxu0 %v2714
    %v2941 = vpop.f32.mrf.mxu0
    %v2942 = vadd.f32 %v2781, %v2941
    %v2943 = vpop.f32.mrf.mxu0
    %v2944 = vpop.f32.mrf.mxu0
    %v2945 = vadd.f32 %v2784, %v2944
    %v2946 = vpop.f32.mrf.mxu0
    %2947 = vmatprep.mubr.bf16.mxu0 0
    %2948 = vmatmul.mubr.bf16.gmra.mxu0 %v2716
    %v2949 = vpop.f32.mrf.mxu0
    %v2950 = vadd.f32 %v2789, %v2949
    %v2951 = vpop.f32.mrf.mxu0
    %v2952 = vpop.f32.mrf.mxu0
    %v2953 = vadd.f32 %v2792, %v2952
    %v2954 = vpop.f32.mrf.mxu0
    %2955 = vmatprep.mubr.bf16.mxu0 0
    %2956 = vmatmul.mubr.bf16.gmra.mxu0 %v2718
    %v2957 = vpop.f32.mrf.mxu0
    %v2958 = vadd.f32 %v2797, %v2957
    %v2959 = vpop.f32.mrf.mxu0
    %v2960 = vpop.f32.mrf.mxu0
    %v2961 = vadd.f32 %v2800, %v2960
    %v2962 = vpop.f32.mrf.mxu0
    %2963 = vmatprep.mubr.bf16.mxu0 0
    %2964 = vmatmul.mubr.bf16.gmra.mxu0 %v2720
    %v2965 = vpop.f32.mrf.mxu0
    %v2966 = vadd.f32 %v2805, %v2965
    %v2967 = vpop.f32.mrf.mxu0
    %v2968 = vpop.f32.mrf.mxu0
    %v2969 = vadd.f32 %v2808, %v2968
    %v2970 = vpop.f32.mrf.mxu0
    %2971 = vmatprep.mubr.bf16.mxu0 0
    %2972 = vmatmul.mubr.bf16.gmra.mxu0 %v2722
    %v2973 = vpop.f32.mrf.mxu0
    %v2974 = vadd.f32 %v2813, %v2973
    %v2975 = vpop.f32.mrf.mxu0
    %v2976 = vpop.f32.mrf.mxu0
    %v2977 = vadd.f32 %v2816, %v2976
    %v2978 = vpop.f32.mrf.mxu0
    %2979 = vmatprep.mubr.bf16.mxu0 0
    %2980 = vmatmul.mubr.bf16.gmra.mxu0 %v2724
    %v2981 = vpop.f32.mrf.mxu0
    %v2982 = vadd.f32 %v2821, %v2981
    %v2983 = vpop.f32.mrf.mxu0
    %v2984 = vpop.f32.mrf.mxu0
    %v2985 = vadd.f32 %v2824, %v2984
    %v2986 = vpop.f32.mrf.mxu0
    %2987 = vmatprep.mubr.bf16.mxu0 0
    %2988 = vmatmul.mubr.bf16.gmra.mxu0 %v2726
    %v2989 = vpop.f32.mrf.mxu0
    %v2990 = vadd.f32 %v2829, %v2989
    %v2991 = vpop.f32.mrf.mxu0
    %v2992 = vpop.f32.mrf.mxu0
    %v2993 = vadd.f32 %v2832, %v2992
    %v2994 = vpop.f32.mrf.mxu0
    %2995 = vmatprep.mubr.bf16.mxu0 0
    %2996 = vmatmul.mubr.bf16.gmra.mxu0 %v2728
    %v2997 = vpop.f32.mrf.mxu0
    %v2998 = vadd.f32 %v2837, %v2997
    %v2999 = vpop.f32.mrf.mxu0
    %v3000 = vpop.f32.mrf.mxu0
    %v3001 = vadd.f32 %v2840, %v3000
    %v3002 = vpop.f32.mrf.mxu0
    %3003 = vmatprep.mubr.bf16.mxu0 0
    %3004 = vmatmul.mubr.bf16.gmra.mxu0 %v2730
    %v3005 = vpop.f32.mrf.mxu0
    %v3006 = vadd.f32 %v2845, %v3005
    %v3007 = vpop.f32.mrf.mxu0
    %v3008 = vpop.f32.mrf.mxu0
    %v3009 = vadd.f32 %v2848, %v3008
    %v3010 = vpop.f32.mrf.mxu0
    %3011 = vmatprep.mubr.bf16.mxu0 0
    %3012 = vmatmul.mubr.bf16.gmra.mxu0 %v2732
    %v3013 = vpop.f32.mrf.mxu0
    %v3014 = vadd.f32 %v2853, %v3013
    %v3015 = vpop.f32.mrf.mxu0
    %v3016 = vpop.f32.mrf.mxu0
    %v3017 = vadd.f32 %v2856, %v3016
    %v3018 = vpop.f32.mrf.mxu0
    %3019 = vmatprep.mubr.bf16.mxu0 0
    %3020 = vmatmul.mubr.bf16.gmra.mxu0 %v2734
    %v3021 = vpop.f32.mrf.mxu0
    %v3022 = vadd.f32 %v2861, %v3021
    %v3023 = vpop.f32.mrf.mxu0
    %v3024 = vpop.f32.mrf.mxu0
    %v3025 = vadd.f32 %v2864, %v3024
    %v3026 = vpop.f32.mrf.mxu0
    %3027 = vmatprep.mubr.bf16.mxu0 0
    %3028 = vmatmul.mubr.bf16.gmra.mxu0 %v2736
    %v3029 = vpop.f32.mrf.mxu0
    %v3030 = vadd.f32 %v2869, %v3029
    %v3031 = vpop.f32.mrf.mxu0
    %v3032 = vpop.f32.mrf.mxu0
    %v3033 = vadd.f32 %v2872, %v3032
    %v3034 = vpop.f32.mrf.mxu0
    %3035 = vmatprep.mubr.bf16.mxu0 0
    %3036 = vmatmul.mubr.bf16.gmra.mxu0 %v2738
    %v3037 = vpop.f32.mrf.mxu0
    %v3038 = vadd.f32 %v2877, %v3037
    %v3039 = vpop.f32.mrf.mxu0
    %v3040 = vpop.f32.mrf.mxu0
    %v3041 = vadd.f32 %v2880, %v3040
    %v3042 = vpop.f32.mrf.mxu0
    %3043 = vmatprep.mubr.bf16.mxu0 0
    %3044 = vmatmul.mubr.bf16.gmra.mxu0 %v2740
    %v3045 = vpop.f32.mrf.mxu0
    %v3046 = vadd.f32 %v2885, %v3045
    %v3047 = vpop.f32.mrf.mxu0
    %v3048 = vpop.f32.mrf.mxu0
    %v3049 = vadd.f32 %v2888, %v3048
    %v3050 = vpop.f32.mrf.mxu0
    %3051 = vmatprep.mubr.bf16.mxu0 0
    %3052 = vmatmul.mubr.bf16.gmra.mxu0 %v2742
    %v3053 = vpop.f32.mrf.mxu0
    %v3054 = vadd.f32 %v2893, %v3053
    %v3055 = vpop.f32.mrf.mxu0
    %v3056 = vpop.f32.mrf.mxu0
    %v3057 = vadd.f32 %v2896, %v3056
    %v3058 = vpop.f32.mrf.mxu0
    %3059 = vmatprep.mubr.bf16.mxu0 0
    %3060 = vmatmul.mubr.bf16.gmra.mxu0 %v2744
    %v3061 = vpop.f32.mrf.mxu0
    %v3062 = vadd.f32 %v2901, %v3061
    %v3063 = vpop.f32.mrf.mxu0
    %v3064 = vpop.f32.mrf.mxu0
    %v3065 = vadd.f32 %v2904, %v3064
    %v3066 = vpop.f32.mrf.mxu0
    %3067 = vdwg.mxu0
    %3068 = vst [vmem:[#allocation2] sm:$0xff] %v2942
    %3069 = vst [vmem:[#allocation2 + $0x8] sm:$0xff] %v2945
    %3070 = vst [vmem:[#allocation2 + $0x10] sm:$0xff] %v2950
    %3071 = vst [vmem:[#allocation2 + $0x18] sm:$0xff] %v2953
    %3072 = vst [vmem:[#allocation2 + $0x20] sm:$0xff] %v2958
    %3073 = vst [vmem:[#allocation2 + $0x28] sm:$0xff] %v2961
    %3074 = vst [vmem:[#allocation2 + $0x30] sm:$0xff] %v2966
    %3075 = vst [vmem:[#allocation2 + $0x38] sm:$0xff] %v2969
    %3076 = vst [vmem:[#allocation2 + $0x40] sm:$0xff] %v2974
    %3077 = vst [vmem:[#allocation2 + $0x48] sm:$0xff] %v2977
    %3078 = vst [vmem:[#allocation2 + $0x50] sm:$0xff] %v2982
    %3079 = vst [vmem:[#allocation2 + $0x58] sm:$0xff] %v2985
    %3080 = vst [vmem:[#allocation2 + $0x60] sm:$0xff] %v2990
    %3081 = vst [vmem:[#allocation2 + $0x68] sm:$0xff] %v2993
    %3082 = vst [vmem:[#allocation2 + $0x70] sm:$0xff] %v2998
    %3083 = vst [vmem:[#allocation2 + $0x78] sm:$0xff] %v3001
    %3084 = vst [vmem:[#allocation2 + $0x80] sm:$0xff] %v3006
    %3085 = vst [vmem:[#allocation2 + $0x88] sm:$0xff] %v3009
    %3086 = vst [vmem:[#allocation2 + $0x90] sm:$0xff] %v3014
    %3087 = vst [vmem:[#allocation2 + $0x98] sm:$0xff] %v3017
    %3088 = vst [vmem:[#allocation2 + $0xa0] sm:$0xff] %v3022
    %3089 = vst [vmem:[#allocation2 + $0xa8] sm:$0xff] %v3025
    %3090 = vst [vmem:[#allocation2 + $0xb0] sm:$0xff] %v3030
    %3091 = vst [vmem:[#allocation2 + $0xb8] sm:$0xff] %v3033
    %3092 = vst [vmem:[#allocation2 + $0xc0] sm:$0xff] %v3038
    %3093 = vst [vmem:[#allocation2 + $0xc8] sm:$0xff] %v3041
    %3094 = vst [vmem:[#allocation2 + $0xd0] sm:$0xff] %v3046
    %3095 = vst [vmem:[#allocation2 + $0xd8] sm:$0xff] %v3049
    %3096 = vst [vmem:[#allocation2 + $0xe0] sm:$0xff] %v3054
    %3097 = vst [vmem:[#allocation2 + $0xe8] sm:$0xff] %v3057
    %3098 = vst [vmem:[#allocation2 + $0xf0] sm:$0xff] %v3062
    %3099 = vst [vmem:[#allocation2 + $0xf8] sm:$0xff] %v3065
    // Predicated region
    $region22: #{tpu_custom_call.1} parent=1 // pred_check
      _
    $region23: #{tpu_custom_call.1} parent=1 // pred_check_branch
      %3101 = sbr.rel (0) target = $region25
    $region24: #{tpu_custom_call.1} parent=1 // pred_region
      %s3103 = ssub.s32 4096, 4096
      %3104 = vsyncadd [#allocation3], %s3103
      %s3105 = sshll.u32 [#allocation2], 4
      %s3106 = int_to_ptr.vmem [resolvable:$true] %s3105
      %3111 = dma.vmem_to_hbm [thread:$0]  %s3106, 4096, %s5, [#allocation3], 128, 128, 8
    $region25: #{tpu_custom_call.1} parent=1 // pred_fallthru
      _
    // Predicated region
    $region26: #{tpu_custom_call.1} parent=1 // pred_check
      _
    $region27: #{tpu_custom_call.1} parent=1 // pred_check_branch
      %3113 = sbr.rel (0) target = $region29
    $region28: #{tpu_custom_call.1} parent=1 // pred_region
      %3114 = dma.done [#allocation3], 4096
    $region29: #{tpu_custom_call.1} parent=1 // pred_fallthru
      _
    %3115 = vsyncpa [#allocation3], 1

</llo_original>
